<compile_context>
chip_gen: v6e
topology: v6e:2x2x1
jax: 0.10.0
libtpu: 0.0.40
codegen_flags: <defaults>
</compile_context>

<pallas_src>
import jax
import jax.numpy as jnp
from jax.experimental import pallas as pl
from jax.experimental.pallas import tpu as pltpu


def _updown_kernel(qfeat_ref, imfeat_ref,
                   w1im_ref, w1q_ref, b1_ref, w2_ref,
                   wc1q_ref, wc1im_ref, bc1_ref, wc2_ref, bc2_ref,
                   out_ref, cls_acc_ref):
    hop = pl.program_id(0)
    n_hops = pl.num_programs(0)
    B, N, C = imfeat_ref.shape
    A = w1im_ref.shape[2]

    qfeat = qfeat_ref[...]                  # (B, Q) bf16
    im3 = imfeat_ref[...]                   # (B, N, C) bf16

    # ---- classifier.lin1 accumulator: init with the qfeat column-chunk of Wc1.
    @pl.when(hop == 0)
    def _init():
        cls_acc_ref[...] = (
            jnp.dot(qfeat, wc1q_ref[...], preferred_element_type=jnp.float32)
            + bc1_ref[...])

    # ---- relu(nlin(cat(imfeat, qtile)))  ==  relu(im @ W1_im + q @ W1_q + b1)
    hid = jnp.dot(im3.reshape(B * N, C), w1im_ref[0],
                  preferred_element_type=jnp.float32).reshape(B, N, A)
    hid = hid + jnp.dot(qfeat, w1q_ref[0],
                        preferred_element_type=jnp.float32)[:, None, :]
    hid = jnp.maximum(hid + b1_ref[...], 0.0)          # b1 block is (1, 1, A)
    # dropout: eval-mode identity.

    # ---- attnmap Linear(1024, 1): VPU multiply + lane reduction (no 1-col MXU op).
    logits = jnp.sum(hid * w2_ref[...], axis=-1)       # (B, N) f32
    # (attnmap bias b2 is a per-hop uniform shift; softmax is shift-invariant.)

    # ---- softmax over the object axis (dim 1), f32 throughout.
    m = jnp.max(logits, axis=1, keepdims=True)
    e = jnp.exp(logits - m)
    attn = e / jnp.sum(e, axis=1, keepdims=True)       # (B, N) f32

    # ---- (attn_map * imfeat).sum(1) as a batched MXU contraction.
    scaled = jax.lax.dot_general(
        attn[:, None, :].astype(jnp.bfloat16), im3,
        dimension_numbers=(((2,), (1,)), ((0,), (0,))),
        preferred_element_type=jnp.float32)[:, 0, :]   # (B, C) f32

    # ---- classifier.lin1 contribution from this hop's attended feature.
    cls_acc_ref[...] += jnp.dot(scaled.astype(jnp.bfloat16), wc1im_ref[0],
                                preferred_element_type=jnp.float32)

    # ---- finalize: relu(lin1(concat_feat)) -> classifier (lane-dense output).
    @pl.when(hop == n_hops - 1)
    def _finalize():
        proj = jnp.maximum(cls_acc_ref[...], 0.0)
        # dropout: eval-mode identity.
        out_ref[...] = (jnp.dot(proj.astype(jnp.bfloat16), wc2_ref[...],
                                preferred_element_type=jnp.float32)
                        + bc2_ref[...])


def updown_forward(qfeat, imfeat, params):
    """UpDown attention hops + classifier in one hop-gridded Pallas kernel."""
    B, Q = qfeat.shape
    _, N, C = imfeat.shape
    H, _, A = params["w1im"].shape
    H2 = params["wc1q"].shape[1]
    ncls = params["wc2"].shape[1]
    ncls_p = ((ncls + 127) // 128) * 128            # lane-dense output slab

    wc2 = jnp.pad(params["wc2"], ((0, 0), (0, ncls_p - ncls)))
    bc2 = jnp.pad(params["bc2"], ((0, 0), (0, ncls_p - ncls)))

    bf16 = jnp.bfloat16
    inputs = (
        qfeat.astype(bf16), imfeat.astype(bf16),
        params["w1im"].astype(bf16), params["w1q"].astype(bf16),
        params["b1"], params["w2"],
        params["wc1q"].astype(bf16), params["wc1im"].astype(bf16),
        params["bc1"], wc2.astype(bf16), bc2,
    )

    grid_spec = pltpu.PrefetchScalarGridSpec(
        num_scalar_prefetch=0,
        grid=(H,),
        in_specs=[
            pl.BlockSpec((B, Q), lambda h: (0, 0)),          # qfeat   (resident)
            pl.BlockSpec((B, N, C), lambda h: (0, 0, 0)),    # imfeat  (resident)
            pl.BlockSpec((1, C, A), lambda h: (h, 0, 0)),    # w1im    (per hop)
            pl.BlockSpec((1, Q, A), lambda h: (h, 0, 0)),    # w1q     (per hop)
            pl.BlockSpec((1, 1, A), lambda h: (h, 0, 0)),    # b1      (per hop)
            pl.BlockSpec((1, 1, A), lambda h: (h, 0, 0)),    # w2 row  (per hop)
            pl.BlockSpec((Q, H2), lambda h: (0, 0)),         # wc1q    (resident)
            pl.BlockSpec((1, C, H2), lambda h: (h, 0, 0)),   # wc1im   (per hop)
            pl.BlockSpec((1, H2), lambda h: (0, 0)),         # bc1     (resident)
            pl.BlockSpec((H2, ncls_p), lambda h: (0, 0)),    # wc2     (resident)
            pl.BlockSpec((1, ncls_p), lambda h: (0, 0)),     # bc2     (resident)
        ],
        out_specs=pl.BlockSpec((B, ncls_p), lambda h: (0, 0)),
        scratch_shapes=[pltpu.VMEM((B, H2), jnp.float32)],   # cls_acc accumulator
    )

    out = pl.pallas_call(
        _updown_kernel,
        out_shape=jax.ShapeDtypeStruct((B, ncls_p), jnp.float32),
        grid_spec=grid_spec,
        compiler_params=pltpu.CompilerParams(
            dimension_semantics=("arbitrary",),     # hop axis carries cls_acc
            vmem_limit_bytes=48 << 20),
    )(*inputs)
    return out[:, :ncls]


def _ref_forward(qfeat, imfeat, params):
    """Pure-JAX reference mirroring the PyTorch forward literally (eval mode)."""
    B, N, C = imfeat.shape
    HOPS = params["w1im"].shape[0]
    concat_feat = qfeat
    for h in range(HOPS):
        qtile = jnp.broadcast_to(qfeat[:, None, :], (B, N, qfeat.shape[1]))
        qi = jnp.concatenate([imfeat, qtile], axis=2)
        w1 = jnp.concatenate([params["w1im"][h], params["w1q"][h]], axis=0)
        hid = jax.nn.relu(qi @ w1 + params["b1"][h])
        logits = hid @ params["w2"][h].T + params["b2"][h]
        attn = jax.nn.softmax(logits, axis=1)
        scaled = jnp.sum(attn * imfeat, axis=1)
        concat_feat = jnp.concatenate([concat_feat, scaled], axis=1)
    wc1 = jnp.concatenate([params["wc1q"]]
                          + [params["wc1im"][h] for h in range(HOPS)], axis=0)
    proj = jax.nn.relu(concat_feat @ wc1 + params["bc1"])
    return proj @ params["wc2"] + params["bc2"]


def _linear_init(key, fan_in, fan_out):
    """PyTorch-style uniform(-1/sqrt(fan_in), 1/sqrt(fan_in)); weight as (in, out)."""
    kw, kb = jax.random.split(key)
    bound = 1.0 / jnp.sqrt(jnp.float32(fan_in))
    w = jax.random.uniform(kw, (fan_in, fan_out), jnp.float32, -bound, bound)
    b = jax.random.uniform(kb, (fan_out,), jnp.float32, -bound, bound)
    return w, b


def make_params(key, *, qdim, cdim, hops, attn_hidden, num_hidden2, num_classes):
    keys = jax.random.split(key, 2 * hops + 2)
    w1im, w1q, b1, w2, b2 = [], [], [], [], []
    for h in range(hops):
        w, b = _linear_init(keys[h], cdim + qdim, attn_hidden)
        w1im.append(w[:cdim])                  # (C, A)
        w1q.append(w[cdim:])                   # (Q, A)
        b1.append(b[None, :])                  # (1, A)
        wa, ba = _linear_init(keys[hops + h], attn_hidden, 1)
        w2.append(wa.T)                        # (1, A)  attnmap weight row
        b2.append(ba[:, None])                 # (1, 1)
    wc1, bc1 = _linear_init(keys[2 * hops], qdim + cdim * hops, num_hidden2)
    wc2, bc2 = _linear_init(keys[2 * hops + 1], num_hidden2, num_classes)
    return {
        "w1im": jnp.stack(w1im),                       # (H, C, A)
        "w1q": jnp.stack(w1q),                         # (H, Q, A)
        "b1": jnp.stack(b1),                           # (H, 1, A)
        "w2": jnp.stack(w2),                           # (H, 1, A)
        "b2": jnp.stack(b2),                           # (H, 1, 1) (reference only)
        "wc1q": wc1[:qdim],                            # (Q, H2)
        "wc1im": jnp.stack([wc1[qdim + h * cdim: qdim + (h + 1) * cdim]
                            for h in range(hops)]),    # (H, C, H2)
        "bc1": bc1[None, :],                           # (1, H2)
        "wc2": wc2,                                    # (H2, NCLS)
        "bc2": bc2[None, :],                           # (1, NCLS)
    }


if __name__ == "__main__":
    # Small synthetic config (use_lstm=False, use_pooled=False).
    B = 2             # batch
    N = 8             # num_objs (spatial image feature locations)
    C = 32            # config.cnn_feat_size
    Q = 32            # qfeat dim (small stand-in for 2048)
    HOPS = 2          # config.num_attn_hops
    ATTN_HIDDEN = 1024
    NUM_HIDDEN2 = 64  # config.num_hidden * 2
    NUM_CLASSES = 10  # config.num_classes

    key = jax.random.PRNGKey(0)
    kq, kim, kp = jax.random.split(key, 3)
    qfeat = jax.random.normal(kq, (B, Q), jnp.float32)
    imfeat = jax.random.normal(kim, (B, N, C), jnp.float32)
    params = make_params(kp, qdim=Q, cdim=C, hops=HOPS, attn_hidden=ATTN_HIDDEN,
                         num_hidden2=NUM_HIDDEN2, num_classes=NUM_CLASSES)

    # Round the bf16-resident tensors once so kernel and reference see identical
    # values (the kernel runs them through the bf16 MXU path with f32 accumulation).
    BF16_KEYS = ("w1im", "w1q", "wc1q", "wc1im", "wc2")
    params = {k: (v.astype(jnp.bfloat16).astype(jnp.float32) if k in BF16_KEYS else v)
              for k, v in params.items()}
    qfeat = qfeat.astype(jnp.bfloat16).astype(jnp.float32)
    imfeat = imfeat.astype(jnp.bfloat16).astype(jnp.float32)

    preds = jax.block_until_ready(updown_forward(qfeat, imfeat, params))
    ref = jax.block_until_ready(_ref_forward(qfeat, imfeat, params))

    assert preds.shape == (B, NUM_CLASSES)
    assert jnp.allclose(preds, ref, rtol=1e-2, atol=1e-2), (
        f"max abs diff {jnp.max(jnp.abs(preds - ref))}")
    print("KERNEL_OK")
</pallas_src>

<mosaic_0001>
module attributes {stable_mosaic.version = 11 : i64} {
  func.func @_updown_kernel(%arg0: i32, %arg1: memref<2x32xbf16, #tpu.memory_space<vmem>>, %arg2: memref<2x8x32xbf16, #tpu.memory_space<vmem>>, %arg3: memref<1x32x1024xbf16, #tpu.memory_space<vmem>>, %arg4: memref<1x32x1024xbf16, #tpu.memory_space<vmem>>, %arg5: memref<1x1x1024xf32, #tpu.memory_space<vmem>>, %arg6: memref<1x1x1024xf32, #tpu.memory_space<vmem>>, %arg7: memref<32x64xbf16, #tpu.memory_space<vmem>>, %arg8: memref<1x32x64xbf16, #tpu.memory_space<vmem>>, %arg9: memref<1x64xf32, #tpu.memory_space<vmem>>, %arg10: memref<64x128xbf16, #tpu.memory_space<vmem>>, %arg11: memref<1x128xf32, #tpu.memory_space<vmem>>, %arg12: memref<2x128xf32, #tpu.memory_space<vmem>>, %arg13: memref<2x64xf32, #tpu.memory_space<vmem>>) attributes {dimension_semantics = [#tpu.dimension_semantics<arbitrary>], iteration_bounds = array<i64: 2>, scalar_prefetch = 0 : i64, scratch_operands = 1 : i64, tpu.core_type = #tpu.core_type<tc>, window_params = [{pipeline_mode = #tpu.pipeline_mode<synchronous>, transform_indices = @transform_0, window_bounds = array<i64: 2, 32>}, {pipeline_mode = #tpu.pipeline_mode<synchronous>, transform_indices = @transform_1, window_bounds = array<i64: 2, 8, 32>}, {transform_indices = @transform_2, window_bounds = array<i64: 1, 32, 1024>}, {transform_indices = @transform_3, window_bounds = array<i64: 1, 32, 1024>}, {transform_indices = @transform_4, window_bounds = array<i64: 1, 1, 1024>}, {transform_indices = @transform_5, window_bounds = array<i64: 1, 1, 1024>}, {pipeline_mode = #tpu.pipeline_mode<synchronous>, transform_indices = @transform_6, window_bounds = array<i64: 32, 64>}, {transform_indices = @transform_7, window_bounds = array<i64: 1, 32, 64>}, {pipeline_mode = #tpu.pipeline_mode<synchronous>, transform_indices = @transform_8, window_bounds = array<i64: 1, 64>}, {pipeline_mode = #tpu.pipeline_mode<synchronous>, transform_indices = @transform_9, window_bounds = array<i64: 64, 128>}, {pipeline_mode = #tpu.pipeline_mode<synchronous>, transform_indices = @transform_10, window_bounds = array<i64: 1, 128>}, {pipeline_mode = #tpu.pipeline_mode<synchronous>, transform_indices = @transform_11, window_bounds = array<i64: 2, 128>}]} {
    %c0 = arith.constant 0 : index
    %c0_0 = arith.constant 0 : index
    %0 = vector.load %arg1[%c0, %c0_0] : memref<2x32xbf16, #tpu.memory_space<vmem>>, vector<2x32xbf16>
    %c0_1 = arith.constant 0 : index
    %c0_2 = arith.constant 0 : index
    %c0_3 = arith.constant 0 : index
    %1 = vector.load %arg2[%c0_1, %c0_2, %c0_3] : memref<2x8x32xbf16, #tpu.memory_space<vmem>>, vector<2x8x32xbf16>
    %c0_i32 = arith.constant 0 : i32
    %2 = arith.cmpi eq, %arg0, %c0_i32 : i32
    %3 = arith.extui %2 : i1 to i32
    %c0_i32_4 = arith.constant 0 : i32
    %4 = arith.cmpi ne, %3, %c0_i32_4 : i32
    scf.if %4 {
      %c0_32 = arith.constant 0 : index
      %c0_33 = arith.constant 0 : index
      %48 = vector.load %arg7[%c0_32, %c0_33] : memref<32x64xbf16, #tpu.memory_space<vmem>>, vector<32x64xbf16>
      %cst_34 = arith.constant dense<0.000000e+00> : vector<2x64xf32>
      %49 = tpu.matmul %0, %48, %cst_34 {dimension_numbers = #tpu.dot_dimension_numbers<[1], [0], [0], [1], [0, 0, 1, 1], [], []>} : vector<2x32xbf16>, vector<32x64xbf16>, vector<2x64xf32> -> vector<2x64xf32>
      %c0_35 = arith.constant 0 : index
      %c0_36 = arith.constant 0 : index
      %50 = vector.load %arg9[%c0_35, %c0_36] : memref<1x64xf32, #tpu.memory_space<vmem>>, vector<1x64xf32>
      %51 = vector.broadcast %50 : vector<1x64xf32> to vector<2x64xf32>
      %52 = arith.addf %49, %51 : vector<2x64xf32>
      %c0_37 = arith.constant 0 : index
      %c0_38 = arith.constant 0 : index
      %53 = vector.load %arg13[%c0_37, %c0_38] : memref<2x64xf32, #tpu.memory_space<vmem>>, vector<2x64xf32>
      tpu.vector_store %arg13[%c0_37, %c0_38], %52 {strides = array<i32>} : memref<2x64xf32, #tpu.memory_space<vmem>>, vector<2x64xf32>,
    } else {
    }
    %5 = vector.shape_cast %1 : vector<2x8x32xbf16> to vector<16x32xbf16>
    %c0_5 = arith.constant 0 : index
    %c0_6 = arith.constant 0 : index
    %c0_7 = arith.constant 0 : index
    %6 = vector.load %arg3[%c0_5, %c0_6, %c0_7] : memref<1x32x1024xbf16, #tpu.memory_space<vmem>>, vector<1x32x1024xbf16>
    %7 = vector.shape_cast %6 : vector<1x32x1024xbf16> to vector<32x1024xbf16>
    %cst = arith.constant dense<0.000000e+00> : vector<16x1024xf32>
    %8 = tpu.matmul %5, %7, %cst {dimension_numbers = #tpu.dot_dimension_numbers<[1], [0], [0], [1], [0, 0, 1, 1], [], []>} : vector<16x32xbf16>, vector<32x1024xbf16>, vector<16x1024xf32> -> vector<16x1024xf32>
    %9 = vector.shape_cast %8 : vector<16x1024xf32> to vector<2x8x1024xf32>
    %c0_8 = arith.constant 0 : index
    %c0_9 = arith.constant 0 : index
    %c0_10 = arith.constant 0 : index
    %10 = vector.load %arg4[%c0_8, %c0_9, %c0_10] : memref<1x32x1024xbf16, #tpu.memory_space<vmem>>, vector<1x32x1024xbf16>
    %11 = vector.shape_cast %10 : vector<1x32x1024xbf16> to vector<32x1024xbf16>
    %cst_11 = arith.constant dense<0.000000e+00> : vector<2x1024xf32>
    %12 = tpu.matmul %0, %11, %cst_11 {dimension_numbers = #tpu.dot_dimension_numbers<[1], [0], [0], [1], [0, 0, 1, 1], [], []>} : vector<2x32xbf16>, vector<32x1024xbf16>, vector<2x1024xf32> -> vector<2x1024xf32>
    %13 = vector.shape_cast %12 : vector<2x1024xf32> to vector<2x1x1024xf32>
    %14 = vector.broadcast %13 : vector<2x1x1024xf32> to vector<2x8x1024xf32>
    %15 = arith.addf %9, %14 : vector<2x8x1024xf32>
    %c0_12 = arith.constant 0 : index
    %c0_13 = arith.constant 0 : index
    %c0_14 = arith.constant 0 : index
    %16 = vector.load %arg5[%c0_12, %c0_13, %c0_14] : memref<1x1x1024xf32, #tpu.memory_space<vmem>>, vector<1x1x1024xf32>
    %17 = vector.broadcast %16 : vector<1x1x1024xf32> to vector<2x8x1024xf32>
    %18 = arith.addf %15, %17 : vector<2x8x1024xf32>
    %cst_15 = arith.constant 0.000000e+00 : f32
    %19 = vector.broadcast %cst_15 : f32 to vector<2x8x1024xf32>
    %20 = arith.maximumf %18, %19 : vector<2x8x1024xf32>
    %c0_16 = arith.constant 0 : index
    %c0_17 = arith.constant 0 : index
    %c0_18 = arith.constant 0 : index
    %21 = vector.load %arg6[%c0_16, %c0_17, %c0_18] : memref<1x1x1024xf32, #tpu.memory_space<vmem>>, vector<1x1x1024xf32>
    %22 = vector.broadcast %21 : vector<1x1x1024xf32> to vector<2x8x1024xf32>
    %23 = arith.mulf %20, %22 : vector<2x8x1024xf32>
    %cst_19 = arith.constant dense<0.000000e+00> : vector<2x8xf32>
    %24 = vector.multi_reduction <add>, %23, %cst_19 [2] : vector<2x8x1024xf32> to vector<2x8xf32>
    %cst_20 = arith.constant dense<0xFF800000> : vector<2xf32>
    %25 = vector.multi_reduction <maximumf>, %24, %cst_20 [1] : vector<2x8xf32> to vector<2xf32>
    %26 = vector.shape_cast %25 : vector<2xf32> to vector<2x1xf32>
    %27 = vector.broadcast %26 : vector<2x1xf32> to vector<2x8xf32>
    %28 = arith.subf %24, %27 : vector<2x8xf32>
    %29 = math.exp %28 : vector<2x8xf32>
    %cst_21 = arith.constant dense<0.000000e+00> : vector<2xf32>
    %30 = vector.multi_reduction <add>, %29, %cst_21 [1] : vector<2x8xf32> to vector<2xf32>
    %31 = vector.shape_cast %30 : vector<2xf32> to vector<2x1xf32>
    %32 = vector.broadcast %31 : vector<2x1xf32> to vector<2x8xf32>
    %33 = arith.divf %29, %32 : vector<2x8xf32>
    %34 = vector.shape_cast %33 : vector<2x8xf32> to vector<2x1x8xf32>
    %35 = arith.truncf %34 : vector<2x1x8xf32> to vector<2x1x8xbf16>
    %cst_22 = arith.constant dense<0.000000e+00> : vector<2x1x32xf32>
    %36 = tpu.matmul %35, %1, %cst_22 {dimension_numbers = #tpu.dot_dimension_numbers<[2], [1], [1], [2], [0, 0, 0, 1, 1, 2], [0], [0]>} : vector<2x1x8xbf16>, vector<2x8x32xbf16>, vector<2x1x32xf32> -> vector<2x1x32xf32>
    %37 = vector.shape_cast %36 : vector<2x1x32xf32> to vector<2x32xf32>
    %c0_23 = arith.constant 0 : index
    %c0_24 = arith.constant 0 : index
    %38 = vector.load %arg13[%c0_23, %c0_24] : memref<2x64xf32, #tpu.memory_space<vmem>>, vector<2x64xf32>
    %39 = arith.truncf %37 : vector<2x32xf32> to vector<2x32xbf16>
    %c0_25 = arith.constant 0 : index
    %c0_26 = arith.constant 0 : index
    %c0_27 = arith.constant 0 : index
    %40 = vector.load %arg8[%c0_25, %c0_26, %c0_27] : memref<1x32x64xbf16, #tpu.memory_space<vmem>>, vector<1x32x64xbf16>
    %41 = vector.shape_cast %40 : vector<1x32x64xbf16> to vector<32x64xbf16>
    %cst_28 = arith.constant dense<0.000000e+00> : vector<2x64xf32>
    %42 = tpu.matmul %39, %41, %cst_28 {dimension_numbers = #tpu.dot_dimension_numbers<[1], [0], [0], [1], [0, 0, 1, 1], [], []>} : vector<2x32xbf16>, vector<32x64xbf16>, vector<2x64xf32> -> vector<2x64xf32>
    %43 = arith.addf %38, %42 : vector<2x64xf32>
    %c0_29 = arith.constant 0 : index
    %c0_30 = arith.constant 0 : index
    %44 = vector.load %arg13[%c0_29, %c0_30] : memref<2x64xf32, #tpu.memory_space<vmem>>, vector<2x64xf32>
    tpu.vector_store %arg13[%c0_29, %c0_30], %43 {strides = array<i32>} : memref<2x64xf32, #tpu.memory_space<vmem>>, vector<2x64xf32>,
    %c1_i32 = arith.constant 1 : i32
    %45 = arith.cmpi eq, %arg0, %c1_i32 : i32
    %46 = arith.extui %45 : i1 to i32
    %c0_i32_31 = arith.constant 0 : i32
    %47 = arith.cmpi ne, %46, %c0_i32_31 : i32
    scf.if %47 {
      %c0_32 = arith.constant 0 : index
      %c0_33 = arith.constant 0 : index
      %48 = vector.load %arg13[%c0_32, %c0_33] : memref<2x64xf32, #tpu.memory_space<vmem>>, vector<2x64xf32>
      %cst_34 = arith.constant 0.000000e+00 : f32
      %49 = vector.broadcast %cst_34 : f32 to vector<2x64xf32>
      %50 = arith.maximumf %48, %49 : vector<2x64xf32>
      %51 = arith.truncf %50 : vector<2x64xf32> to vector<2x64xbf16>
      %c0_35 = arith.constant 0 : index
      %c0_36 = arith.constant 0 : index
      %52 = vector.load %arg10[%c0_35, %c0_36] : memref<64x128xbf16, #tpu.memory_space<vmem>>, vector<64x128xbf16>
      %cst_37 = arith.constant dense<0.000000e+00> : vector<2x128xf32>
      %53 = tpu.matmul %51, %52, %cst_37 {dimension_numbers = #tpu.dot_dimension_numbers<[1], [0], [0], [1], [0, 0, 1, 1], [], []>} : vector<2x64xbf16>, vector<64x128xbf16>, vector<2x128xf32> -> vector<2x128xf32>
      %c0_38 = arith.constant 0 : index
      %c0_39 = arith.constant 0 : index
      %54 = vector.load %arg11[%c0_38, %c0_39] : memref<1x128xf32, #tpu.memory_space<vmem>>, vector<1x128xf32>
      %55 = vector.broadcast %54 : vector<1x128xf32> to vector<2x128xf32>
      %56 = arith.addf %53, %55 : vector<2x128xf32>
      %c0_40 = arith.constant 0 : index
      %c0_41 = arith.constant 0 : index
      %57 = vector.load %arg12[%c0_40, %c0_41] : memref<2x128xf32, #tpu.memory_space<vmem>>, vector<2x128xf32>
      tpu.vector_store %arg12[%c0_40, %c0_41], %56 {strides = array<i32>} : memref<2x128xf32, #tpu.memory_space<vmem>>, vector<2x128xf32>,
    } else {
    }
    return
  }
  func.func @transform_0(%arg0: i32) -> (i32, i32) {
    %c0_i32 = arith.constant 0 : i32
    %c0_i32_0 = arith.constant 0 : i32
    %c0_i32_1 = arith.constant 0 : i32
    return %c0_i32, %c0_i32_0 : i32, i32
  }
  func.func @transform_1(%arg0: i32) -> (i32, i32, i32) {
    %c0_i32 = arith.constant 0 : i32
    %c0_i32_0 = arith.constant 0 : i32
    %c0_i32_1 = arith.constant 0 : i32
    %c0_i32_2 = arith.constant 0 : i32
    return %c0_i32, %c0_i32_0, %c0_i32_1 : i32, i32, i32
  }
  func.func @transform_2(%arg0: i32) -> (i32, i32, i32) {
    %c0_i32 = arith.constant 0 : i32
    %c0_i32_0 = arith.constant 0 : i32
    %c0_i32_1 = arith.constant 0 : i32
    return %arg0, %c0_i32, %c0_i32_0 : i32, i32, i32
  }
  func.func @transform_3(%arg0: i32) -> (i32, i32, i32) {
    %c0_i32 = arith.constant 0 : i32
    %c0_i32_0 = arith.constant 0 : i32
    %c0_i32_1 = arith.constant 0 : i32
    return %arg0, %c0_i32, %c0_i32_0 : i32, i32, i32
  }
  func.func @transform_4(%arg0: i32) -> (i32, i32, i32) {
    %c0_i32 = arith.constant 0 : i32
    %c0_i32_0 = arith.constant 0 : i32
    %c0_i32_1 = arith.constant 0 : i32
    return %arg0, %c0_i32, %c0_i32_0 : i32, i32, i32
  }
  func.func @transform_5(%arg0: i32) -> (i32, i32, i32) {
    %c0_i32 = arith.constant 0 : i32
    %c0_i32_0 = arith.constant 0 : i32
    %c0_i32_1 = arith.constant 0 : i32
    return %arg0, %c0_i32, %c0_i32_0 : i32, i32, i32
  }
  func.func @transform_6(%arg0: i32) -> (i32, i32) {
    %c0_i32 = arith.constant 0 : i32
    %c0_i32_0 = arith.constant 0 : i32
    %c0_i32_1 = arith.constant 0 : i32
    return %c0_i32, %c0_i32_0 : i32, i32
  }
  func.func @transform_7(%arg0: i32) -> (i32, i32, i32) {
    %c0_i32 = arith.constant 0 : i32
    %c0_i32_0 = arith.constant 0 : i32
    %c0_i32_1 = arith.constant 0 : i32
    return %arg0, %c0_i32, %c0_i32_0 : i32, i32, i32
  }
  func.func @transform_8(%arg0: i32) -> (i32, i32) {
    %c0_i32 = arith.constant 0 : i32
    %c0_i32_0 = arith.constant 0 : i32
    %c0_i32_1 = arith.constant 0 : i32
    return %c0_i32, %c0_i32_0 : i32, i32
  }
  func.func @transform_9(%arg0: i32) -> (i32, i32) {
    %c0_i32 = arith.constant 0 : i32
    %c0_i32_0 = arith.constant 0 : i32
    %c0_i32_1 = arith.constant 0 : i32
    return %c0_i32, %c0_i32_0 : i32, i32
  }
  func.func @transform_10(%arg0: i32) -> (i32, i32) {
    %c0_i32 = arith.constant 0 : i32
    %c0_i32_0 = arith.constant 0 : i32
    %c0_i32_1 = arith.constant 0 : i32
    return %c0_i32, %c0_i32_0 : i32, i32
  }
  func.func @transform_11(%arg0: i32) -> (i32, i32) {
    %c0_i32 = arith.constant 0 : i32
    %c0_i32_0 = arith.constant 0 : i32
    %c0_i32_1 = arith.constant 0 : i32
    return %c0_i32, %c0_i32_0 : i32, i32
  }
}

</mosaic_0001>

<llo_original>
// kernel: tpu_custom_call.1
$region0: #{tpu_custom_call.1}
  #allocation0 [shape = 'u32[]', space=smem, size = 0x4, offset = 0x4, fixed_abs, tag = 'smem constant byte address 0x4 - core index']
  #allocation1 [shape = 'u32[144,128]{1,0:T(1,128)}', space=vmem, size = 0x12000, scoped, tag = 'internal scratch']
  #allocation2 [shape = 'f32[2,64]{1,0:T(2,128)}', space=vmem, size = 0x400, scoped, tag = 'scratch operand']
  %s0 = inlined_call_operand.hbm [shape: bf16[2,32], index: 0, kind: input, shape index: {}]
  %s1 = inlined_call_operand.hbm [shape: bf16[2,8,32], index: 1, kind: input, shape index: {}]
  %s2 = inlined_call_operand.hbm [shape: bf16[2,32,1024], index: 2, kind: input, shape index: {}]
  %s3 = inlined_call_operand.hbm [shape: bf16[2,32,1024], index: 3, kind: input, shape index: {}]
  %s4 = inlined_call_operand.hbm [shape: f32[2,1,1024], index: 4, kind: input, shape index: {}]
  %s5 = inlined_call_operand.hbm [shape: f32[2,1,1024], index: 5, kind: input, shape index: {}]
  %s6 = inlined_call_operand.hbm [shape: bf16[32,64], index: 6, kind: input, shape index: {}]
  %s7 = inlined_call_operand.hbm [shape: bf16[2,32,64], index: 7, kind: input, shape index: {}]
  %s8 = inlined_call_operand.vmem [shape: f32[1,64], index: 8, kind: input, shape index: {}]
  %s9 = inlined_call_operand.hbm [shape: bf16[64,128], index: 9, kind: input, shape index: {}]
  %s10 = inlined_call_operand.vmem [shape: f32[1,128], index: 10, kind: input, shape index: {}]
  %s11 = inlined_call_operand.hbm [shape: f32[2,128], index: 11, kind: output, shape index: {}]
  %s12 = sld [smem:[#allocation0]]
  $region121: #{tpu_custom_call.1} parent=0
    _
  %s14 = ssub.s32 1, %s12
  %s15 = scalar_select 0, %s14, %s12
  $region1: #{tpu_custom_call.1} parent=0
    #allocation3 [shape = 'u8[512]{0}', space=vmem, size = 0x400, scoped, tag = 'input window, operand 0, single buffered']
    #allocation4 [shape = 's32[2]{0}', space=sflag, size = 0x8, scoped, tag = 'scoped memory for tpu_custom_call.1']
    #allocation5 [shape = 's32[2]{0}', space=sflag, size = 0x8, scoped, tag = 'scoped memory for tpu_custom_call.1']
    #allocation6 [shape = 'u8[4096]{0}', space=vmem, size = 0x1000, scoped, tag = 'input window, operand 1, single buffered']
    #allocation7 [shape = 's32[1]{0}', space=sflag, size = 0x4, scoped, tag = 'scoped memory for tpu_custom_call.1']
    #allocation8 [shape = 'u8[131072]{0}', space=vmem, size = 0x20000, scoped, tag = 'input window, operand 2']
    #allocation9 [shape = 'u8[131072]{0}', space=vmem, size = 0x20000, scoped, tag = 'input window, operand 3']
    #allocation10 [shape = 'u8[8192]{0}', space=vmem, size = 0x2000, scoped, tag = 'input window, operand 4']
    #allocation11 [shape = 'u8[8192]{0}', space=vmem, size = 0x2000, scoped, tag = 'input window, operand 5']
    #allocation12 [shape = 'u8[8192]{0}', space=vmem, size = 0x2000, scoped, tag = 'input window, operand 6, single buffered']
    #allocation13 [shape = 'u8[16384]{0}', space=vmem, size = 0x4000, scoped, tag = 'input window, operand 7']
    #allocation14 [shape = 's32[2]{0}', space=sflag, size = 0x8, scoped, tag = 'scoped memory for tpu_custom_call.1']
    #allocation15 [shape = 'u8[16384]{0}', space=vmem, size = 0x4000, scoped, tag = 'input window, operand 9, single buffered']
    #allocation16 [shape = 'u8[1024]{0}', space=vmem, size = 0x400, scoped, tag = 'output window, operand 0, single buffered']
    %16 = vsyncpa [#allocation4], 0
    %17 = vsyncpa [#allocation7], 0
    %18 = vsyncpa [#allocation14], 0
    %s19 = scalar_lea.sflag [#allocation14], 1
    %20 = vsyncpa %s19, 0
    %21 = vsyncpa [#allocation5], 0
    loop: start=0, step=1, limit=4
    $region2: #{tpu_custom_call.1} parent=1 // loop_pre_header
      _
    $region3: #{tpu_custom_call.1} parent=1 // loop_header
      %s23 = sphi 0, %s27
      %p24 = scmp.ge.s32.totalorder %s23, 4
      %s31 = sphi 0, %s31
      %s33 = sphi 0, %s31
      %s34 = sphi 0, %s33
      %s48 = sphi 0, %s34
      %s52 = sphi 0, %s52
      %s54 = sphi 0, %s52
      %s55 = sphi 0, %s54
      %s69 = sphi 0, %s55
      %s75 = sphi 0, %s77
      %s78 = sphi 0, %s75
      %s79 = sphi 0, %s78
      %s95 = sphi 0, %s79
      %s101 = sphi 0, %s103
      %s104 = sphi 0, %s101
      %s105 = sphi 0, %s104
      %s121 = sphi 0, %s105
      %s127 = sphi 0, %s129
      %s130 = sphi 0, %s127
      %s131 = sphi 0, %s130
      %s147 = sphi 0, %s131
      %s153 = sphi 0, %s155
      %s156 = sphi 0, %s153
      %s157 = sphi 0, %s156
      %s173 = sphi 0, %s157
      %s177 = sphi 0, %s177
      %s179 = sphi 0, %s177
      %s180 = sphi 0, %s179
      %s194 = sphi 0, %s180
      %s200 = sphi 0, %s202
      %s203 = sphi 0, %s200
      %s204 = sphi 0, %s203
      %s220 = sphi 0, %s204
      %s224 = sphi 0, %s224
      %s226 = sphi 0, %s224
      %s227 = sphi 0, %s226
      %s241 = sphi 0, %s227
      %s245 = sphi 0, %s245
      %s247 = sphi 0, %s245
      %s248 = sphi 0, %s247
      %s262 = sphi 0, %s248
      %s266 = sphi 0, %s266
      %s268 = sphi 0, %s266
      %s269 = sphi 0, %s268
      %s283 = sphi 0, %s269
      %s287 = sphi 0, %s287
      %s289 = sphi 0, %s287
      %s290 = sphi 0, %s289
      %s304 = sphi 0, %s290
    $region4: #{tpu_custom_call.1} parent=1 // loop_header_branch
      %26 = sbr.rel (%p24) target = $region8
    $region5: #{tpu_custom_call.1} parent=1 // loop_body
      %s28 = ssub.s32 %s23, 1
      %s29 = ssub.s32 %s23, 2
      %s30 = sadd.s32 %s23, 1
      %s32 = sadd.s32 %s31, 1
      %p35 = scmp.eq.s32.totalorder %s23, 1
      %p36 = scmp.ne.s32.totalorder %s31, %s33
      %p37 = scmp.eq.s32.totalorder %s23, 0
      %p38 = por %p36, %p37
      %p39 = scmp.ne.s32.totalorder %s31, %s33
      %p40 = scmp.eq.s32.totalorder %s28, 1
      %p41 = por %p39, %p40
      %p42 = scmp.ne.s32.totalorder %s33, %s34
      %p43 = scmp.eq.s32.totalorder %s28, 0
      %p44 = por %p42, %p43
      %p45 = scmp.ne.s32.totalorder %s33, %s34
      %p46 = scmp.eq.s32.totalorder %s29, 1
      %p47 = por %p45, %p46
      %p49 = scmp.ne.s32.totalorder %s34, %s48
      %p50 = scmp.eq.s32.totalorder %s29, 0
      %p51 = por %p49, %p50
      %s53 = sadd.s32 %s52, 1
      %p56 = scmp.eq.s32.totalorder %s23, 1
      %p57 = scmp.ne.s32.totalorder %s52, %s54
      %p58 = scmp.eq.s32.totalorder %s23, 0
      %p59 = por %p57, %p58
      %p60 = scmp.ne.s32.totalorder %s52, %s54
      %p61 = scmp.eq.s32.totalorder %s28, 1
      %p62 = por %p60, %p61
      %p63 = scmp.ne.s32.totalorder %s54, %s55
      %p64 = scmp.eq.s32.totalorder %s28, 0
      %p65 = por %p63, %p64
      %p66 = scmp.ne.s32.totalorder %s54, %s55
      %p67 = scmp.eq.s32.totalorder %s29, 1
      %p68 = por %p66, %p67
      %p70 = scmp.ne.s32.totalorder %s55, %s69
      %p71 = scmp.eq.s32.totalorder %s29, 0
      %p72 = por %p70, %p71
      %s73 = ssub.s32 %s23, %s30
      %p74 = scmp.eq.s32.totalorder %s73, 0
      %s76 = sadd.s32 %s75, 1
      %s77 = scalar_select %p74, %s75, %s76
      %p80 = pneg %p74
      %p81 = scmp.eq.s32.totalorder %s23, 1
      %p82 = por %p80, %p81
      %p83 = scmp.ne.s32.totalorder %s75, %s78
      %p84 = scmp.eq.s32.totalorder %s23, 0
      %p85 = por %p83, %p84
      %p86 = scmp.ne.s32.totalorder %s75, %s78
      %p87 = scmp.eq.s32.totalorder %s28, 1
      %p88 = por %p86, %p87
      %p89 = scmp.ne.s32.totalorder %s78, %s79
      %p90 = scmp.eq.s32.totalorder %s28, 0
      %p91 = por %p89, %p90
      %p92 = scmp.ne.s32.totalorder %s78, %s79
      %p93 = scmp.eq.s32.totalorder %s29, 1
      %p94 = por %p92, %p93
      %p96 = scmp.ne.s32.totalorder %s79, %s95
      %p97 = scmp.eq.s32.totalorder %s29, 0
      %p98 = por %p96, %p97
      %s99 = ssub.s32 %s23, %s30
      %p100 = scmp.eq.s32.totalorder %s99, 0
      %s102 = sadd.s32 %s101, 1
      %s103 = scalar_select %p100, %s101, %s102
      %p106 = pneg %p100
      %p107 = scmp.eq.s32.totalorder %s23, 1
      %p108 = por %p106, %p107
      %p109 = scmp.ne.s32.totalorder %s101, %s104
      %p110 = scmp.eq.s32.totalorder %s23, 0
      %p111 = por %p109, %p110
      %p112 = scmp.ne.s32.totalorder %s101, %s104
      %p113 = scmp.eq.s32.totalorder %s28, 1
      %p114 = por %p112, %p113
      %p115 = scmp.ne.s32.totalorder %s104, %s105
      %p116 = scmp.eq.s32.totalorder %s28, 0
      %p117 = por %p115, %p116
      %p118 = scmp.ne.s32.totalorder %s104, %s105
      %p119 = scmp.eq.s32.totalorder %s29, 1
      %p120 = por %p118, %p119
      %p122 = scmp.ne.s32.totalorder %s105, %s121
      %p123 = scmp.eq.s32.totalorder %s29, 0
      %p124 = por %p122, %p123
      %s125 = ssub.s32 %s23, %s30
      %p126 = scmp.eq.s32.totalorder %s125, 0
      %s128 = sadd.s32 %s127, 1
      %s129 = scalar_select %p126, %s127, %s128
      %p132 = pneg %p126
      %p133 = scmp.eq.s32.totalorder %s23, 1
      %p134 = por %p132, %p133
      %p135 = scmp.ne.s32.totalorder %s127, %s130
      %p136 = scmp.eq.s32.totalorder %s23, 0
      %p137 = por %p135, %p136
      %p138 = scmp.ne.s32.totalorder %s127, %s130
      %p139 = scmp.eq.s32.totalorder %s28, 1
      %p140 = por %p138, %p139
      %p141 = scmp.ne.s32.totalorder %s130, %s131
      %p142 = scmp.eq.s32.totalorder %s28, 0
      %p143 = por %p141, %p142
      %p144 = scmp.ne.s32.totalorder %s130, %s131
      %p145 = scmp.eq.s32.totalorder %s29, 1
      %p146 = por %p144, %p145
      %p148 = scmp.ne.s32.totalorder %s131, %s147
      %p149 = scmp.eq.s32.totalorder %s29, 0
      %p150 = por %p148, %p149
      %s151 = ssub.s32 %s23, %s30
      %p152 = scmp.eq.s32.totalorder %s151, 0
      %s154 = sadd.s32 %s153, 1
      %s155 = scalar_select %p152, %s153, %s154
      %p158 = pneg %p152
      %p159 = scmp.eq.s32.totalorder %s23, 1
      %p160 = por %p158, %p159
      %p161 = scmp.ne.s32.totalorder %s153, %s156
      %p162 = scmp.eq.s32.totalorder %s23, 0
      %p163 = por %p161, %p162
      %p164 = scmp.ne.s32.totalorder %s153, %s156
      %p165 = scmp.eq.s32.totalorder %s28, 1
      %p166 = por %p164, %p165
      %p167 = scmp.ne.s32.totalorder %s156, %s157
      %p168 = scmp.eq.s32.totalorder %s28, 0
      %p169 = por %p167, %p168
      %p170 = scmp.ne.s32.totalorder %s156, %s157
      %p171 = scmp.eq.s32.totalorder %s29, 1
      %p172 = por %p170, %p171
      %p174 = scmp.ne.s32.totalorder %s157, %s173
      %p175 = scmp.eq.s32.totalorder %s29, 0
      %p176 = por %p174, %p175
      %s178 = sadd.s32 %s177, 1
      %p181 = scmp.eq.s32.totalorder %s23, 1
      %p182 = scmp.ne.s32.totalorder %s177, %s179
      %p183 = scmp.eq.s32.totalorder %s23, 0
      %p184 = por %p182, %p183
      %p185 = scmp.ne.s32.totalorder %s177, %s179
      %p186 = scmp.eq.s32.totalorder %s28, 1
      %p187 = por %p185, %p186
      %p188 = scmp.ne.s32.totalorder %s179, %s180
      %p189 = scmp.eq.s32.totalorder %s28, 0
      %p190 = por %p188, %p189
      %p191 = scmp.ne.s32.totalorder %s179, %s180
      %p192 = scmp.eq.s32.totalorder %s29, 1
      %p193 = por %p191, %p192
      %p195 = scmp.ne.s32.totalorder %s180, %s194
      %p196 = scmp.eq.s32.totalorder %s29, 0
      %p197 = por %p195, %p196
      %s198 = ssub.s32 %s23, %s30
      %p199 = scmp.eq.s32.totalorder %s198, 0
      %s201 = sadd.s32 %s200, 1
      %s202 = scalar_select %p199, %s200, %s201
      %p205 = pneg %p199
      %p206 = scmp.eq.s32.totalorder %s23, 1
      %p207 = por %p205, %p206
      %p208 = scmp.ne.s32.totalorder %s200, %s203
      %p209 = scmp.eq.s32.totalorder %s23, 0
      %p210 = por %p208, %p209
      %p211 = scmp.ne.s32.totalorder %s200, %s203
      %p212 = scmp.eq.s32.totalorder %s28, 1
      %p213 = por %p211, %p212
      %p214 = scmp.ne.s32.totalorder %s203, %s204
      %p215 = scmp.eq.s32.totalorder %s28, 0
      %p216 = por %p214, %p215
      %p217 = scmp.ne.s32.totalorder %s203, %s204
      %p218 = scmp.eq.s32.totalorder %s29, 1
      %p219 = por %p217, %p218
      %p221 = scmp.ne.s32.totalorder %s204, %s220
      %p222 = scmp.eq.s32.totalorder %s29, 0
      %p223 = por %p221, %p222
      %s225 = sadd.s32 %s224, 1
      %p228 = scmp.eq.s32.totalorder %s23, 1
      %p229 = scmp.ne.s32.totalorder %s224, %s226
      %p230 = scmp.eq.s32.totalorder %s23, 0
      %p231 = por %p229, %p230
      %p232 = scmp.ne.s32.totalorder %s224, %s226
      %p233 = scmp.eq.s32.totalorder %s28, 1
      %p234 = por %p232, %p233
      %p235 = scmp.ne.s32.totalorder %s226, %s227
      %p236 = scmp.eq.s32.totalorder %s28, 0
      %p237 = por %p235, %p236
      %p238 = scmp.ne.s32.totalorder %s226, %s227
      %p239 = scmp.eq.s32.totalorder %s29, 1
      %p240 = por %p238, %p239
      %p242 = scmp.ne.s32.totalorder %s227, %s241
      %p243 = scmp.eq.s32.totalorder %s29, 0
      %p244 = por %p242, %p243
      %s246 = sadd.s32 %s245, 1
      %p249 = scmp.eq.s32.totalorder %s23, 1
      %p250 = scmp.ne.s32.totalorder %s245, %s247
      %p251 = scmp.eq.s32.totalorder %s23, 0
      %p252 = por %p250, %p251
      %p253 = scmp.ne.s32.totalorder %s245, %s247
      %p254 = scmp.eq.s32.totalorder %s28, 1
      %p255 = por %p253, %p254
      %p256 = scmp.ne.s32.totalorder %s247, %s248
      %p257 = scmp.eq.s32.totalorder %s28, 0
      %p258 = por %p256, %p257
      %p259 = scmp.ne.s32.totalorder %s247, %s248
      %p260 = scmp.eq.s32.totalorder %s29, 1
      %p261 = por %p259, %p260
      %p263 = scmp.ne.s32.totalorder %s248, %s262
      %p264 = scmp.eq.s32.totalorder %s29, 0
      %p265 = por %p263, %p264
      %s267 = sadd.s32 %s266, 1
      %p270 = scmp.eq.s32.totalorder %s23, 1
      %p271 = scmp.ne.s32.totalorder %s266, %s268
      %p272 = scmp.eq.s32.totalorder %s23, 0
      %p273 = por %p271, %p272
      %p274 = scmp.ne.s32.totalorder %s266, %s268
      %p275 = scmp.eq.s32.totalorder %s28, 1
      %p276 = por %p274, %p275
      %p277 = scmp.ne.s32.totalorder %s268, %s269
      %p278 = scmp.eq.s32.totalorder %s28, 0
      %p279 = por %p277, %p278
      %p280 = scmp.ne.s32.totalorder %s268, %s269
      %p281 = scmp.eq.s32.totalorder %s29, 1
      %p282 = por %p280, %p281
      %p284 = scmp.ne.s32.totalorder %s269, %s283
      %p285 = scmp.eq.s32.totalorder %s29, 0
      %p286 = por %p284, %p285
      %s288 = sadd.s32 %s287, 1
      %p291 = scmp.eq.s32.totalorder %s23, 1
      %p292 = scmp.ne.s32.totalorder %s287, %s289
      %p293 = scmp.eq.s32.totalorder %s23, 0
      %p294 = por %p292, %p293
      %p295 = scmp.ne.s32.totalorder %s287, %s289
      %p296 = scmp.eq.s32.totalorder %s28, 1
      %p297 = por %p295, %p296
      %p298 = scmp.ne.s32.totalorder %s289, %s290
      %p299 = scmp.eq.s32.totalorder %s28, 0
      %p300 = por %p298, %p299
      %p301 = scmp.ne.s32.totalorder %s289, %s290
      %p302 = scmp.eq.s32.totalorder %s29, 1
      %p303 = por %p301, %p302
      %p305 = scmp.ne.s32.totalorder %s290, %s304
      %p306 = scmp.eq.s32.totalorder %s29, 0
      %p307 = por %p305, %p306
      %p308 = scmp.le.s32.totalorder 1, %s23
      %p309 = scmp.lt.s32.totalorder %s23, 3
      %p310 = pnand %p308, %p309
      %p311 = pneg %p310
      // Predicated region
      $region9: #{tpu_custom_call.1} parent=5 // pred_check
        _
      $region10: #{tpu_custom_call.1} parent=5 // pred_check_branch
        %313 = sbr.rel (%p310) target = $region12
      $region11: #{tpu_custom_call.1} parent=5 // pred_region
        %s314 = ssub.s32 %s23, 1
        // Predicated region
        $region13: #{tpu_custom_call.1} parent=11 // pred_check
          %p315 = pneg %p44
        $region14: #{tpu_custom_call.1} parent=11 // pred_check_branch
          %317 = sbr.rel (%p315) target = $region16
        $region15: #{tpu_custom_call.1} parent=11 // pred_region
          %s319 = ssub.s32 16, 16
          %320 = vsyncadd [#allocation4], %s319
          %s322 = sshll.u32 [#allocation3], 4
          %s323 = int_to_ptr.vmem [resolvable:$true] %s322
          %325 = dma.hbm_to_vmem [thread:$0]  %s0, 16, %s323, [#allocation4]
        $region16: #{tpu_custom_call.1} parent=11 // pred_fallthru
          _
        // Predicated region
        $region17: #{tpu_custom_call.1} parent=11 // pred_check
          %p326 = pneg %p65
        $region18: #{tpu_custom_call.1} parent=11 // pred_check_branch
          %328 = sbr.rel (%p326) target = $region20
        $region19: #{tpu_custom_call.1} parent=11 // pred_region
          %s330 = ssub.s32 128, 128
          %331 = vsyncadd [#allocation7], %s330
          %s332 = sshll.u32 [#allocation6], 4
          %s333 = int_to_ptr.vmem [resolvable:$true] %s332
          %338 = dma.hbm_to_vmem [thread:$0]  %s1, 128, %s333, [#allocation7], 64, 64, 4
        $region20: #{tpu_custom_call.1} parent=11 // pred_fallthru
          _
        // Predicated region
        $region21: #{tpu_custom_call.1} parent=11 // pred_check
          %p339 = pneg %p190
        $region22: #{tpu_custom_call.1} parent=11 // pred_check_branch
          %341 = sbr.rel (%p339) target = $region24
        $region23: #{tpu_custom_call.1} parent=11 // pred_region
          %s343 = ssub.s32 256, 256
          %344 = vsyncadd [#allocation7], %s343
          %s345 = sshll.u32 [#allocation12], 4
          %s346 = int_to_ptr.vmem [resolvable:$true] %s345
          %351 = dma.hbm_to_vmem [thread:$0]  %s6, 256, %s346, [#allocation7], 64, 64, 4
        $region24: #{tpu_custom_call.1} parent=11 // pred_fallthru
          _
        // Predicated region
        $region25: #{tpu_custom_call.1} parent=11 // pred_check
          %p352 = pneg %p237
        $region26: #{tpu_custom_call.1} parent=11 // pred_check_branch
          %354 = sbr.rel (%p352) target = $region28
        $region27: #{tpu_custom_call.1} parent=11 // pred_region
          _
        $region28: #{tpu_custom_call.1} parent=11 // pred_fallthru
          _
        // Predicated region
        $region29: #{tpu_custom_call.1} parent=11 // pred_check
          %p355 = pneg %p258
        $region30: #{tpu_custom_call.1} parent=11 // pred_check_branch
          %357 = sbr.rel (%p355) target = $region32
        $region31: #{tpu_custom_call.1} parent=11 // pred_region
          %s359 = ssub.s32 512, 512
          %360 = vsyncadd [#allocation14], %s359
          %s361 = sshll.u32 [#allocation15], 4
          %s362 = int_to_ptr.vmem [resolvable:$true] %s361
          %367 = dma.hbm_to_vmem [thread:$0]  %s9, 512, %s362, [#allocation14], 64, 64, 4
        $region32: #{tpu_custom_call.1} parent=11 // pred_fallthru
          _
        // Predicated region
        $region33: #{tpu_custom_call.1} parent=11 // pred_check
          %p368 = pneg %p279
        $region34: #{tpu_custom_call.1} parent=11 // pred_check_branch
          %370 = sbr.rel (%p368) target = $region36
        $region35: #{tpu_custom_call.1} parent=11 // pred_region
          _
        $region36: #{tpu_custom_call.1} parent=11 // pred_fallthru
          _
      $region12: #{tpu_custom_call.1} parent=5 // pred_fallthru
        _
      %p371 = scmp.lt.s32.totalorder %s23, 2
      // Predicated region
      $region37: #{tpu_custom_call.1} parent=5 // pred_check
        %p372 = pneg %p371
      $region38: #{tpu_custom_call.1} parent=5 // pred_check_branch
        %374 = sbr.rel (%p372) target = $region40
      $region39: #{tpu_custom_call.1} parent=5 // pred_region
        // Predicated region
        $region41: #{tpu_custom_call.1} parent=39 // pred_check
          %p375 = pneg %p85
        $region42: #{tpu_custom_call.1} parent=39 // pred_check_branch
          %377 = sbr.rel (%p375) target = $region44
        $region43: #{tpu_custom_call.1} parent=39 // pred_region
          %s378 = sand.u32 %s23, 1
          %s379 = scalar_lea.sflag [#allocation4], %s378
          %s380 = sand.u32 %s75, 1
          %s381 = smul.addr %s380, 128
          %s382 = scalar_lea.vmem [#allocation8], %s381
          %s384 = ssub.s32 2048, 2048
          %385 = vsyncadd %s379, %s384
          %s386 = smul.addr %s23, 32
          %s387 = smul.addr %s386, 64
          %s388 = scalar_lea.hbm %s2, %s387
          %s389 = sshll.u32 %s382, 4
          %s390 = int_to_ptr.vmem [resolvable:$true] %s389
          %395 = dma.hbm_to_vmem [thread:$0]  %s388, 2048, %s390, %s379, 512, 512, 32
        $region44: #{tpu_custom_call.1} parent=39 // pred_fallthru
          _
        // Predicated region
        $region45: #{tpu_custom_call.1} parent=39 // pred_check
          %p396 = pneg %p111
        $region46: #{tpu_custom_call.1} parent=39 // pred_check_branch
          %398 = sbr.rel (%p396) target = $region48
        $region47: #{tpu_custom_call.1} parent=39 // pred_region
          %s399 = sand.u32 %s23, 1
          %s400 = scalar_lea.sflag [#allocation4], %s399
          %s401 = sand.u32 %s101, 1
          %s402 = smul.addr %s401, 128
          %s403 = scalar_lea.vmem [#allocation9], %s402
          %s405 = ssub.s32 2048, 2048
          %406 = vsyncadd %s400, %s405
          %s407 = smul.addr %s23, 32
          %s408 = smul.addr %s407, 64
          %s409 = scalar_lea.hbm %s3, %s408
          %s410 = sshll.u32 %s403, 4
          %s411 = int_to_ptr.vmem [resolvable:$true] %s410
          %416 = dma.hbm_to_vmem [thread:$0]  %s409, 2048, %s411, %s400, 512, 512, 32
        $region48: #{tpu_custom_call.1} parent=39 // pred_fallthru
          _
        // Predicated region
        $region49: #{tpu_custom_call.1} parent=39 // pred_check
          %p417 = pneg %p137
        $region50: #{tpu_custom_call.1} parent=39 // pred_check_branch
          %419 = sbr.rel (%p417) target = $region52
        $region51: #{tpu_custom_call.1} parent=39 // pred_region
          %s420 = sand.u32 %s23, 1
          %s421 = scalar_lea.sflag [#allocation4], %s420
          %s422 = sand.u32 %s127, 1
          %s423 = smul.addr %s422, 8
          %s424 = scalar_lea.vmem [#allocation10], %s423
          %s426 = ssub.s32 128, 128
          %427 = vsyncadd %s421, %s426
          %s428 = smul.addr %s23, 8
          %s429 = smul.addr %s428, 16
          %s430 = scalar_lea.hbm %s4, %s429
          %s432 = sshll.u32 %s424, 4
          %s433 = int_to_ptr.vmem [resolvable:$true] %s432
          %435 = dma.hbm_to_vmem [thread:$0]  %s430, 128, %s433, %s421
        $region52: #{tpu_custom_call.1} parent=39 // pred_fallthru
          _
        // Predicated region
        $region53: #{tpu_custom_call.1} parent=39 // pred_check
          %p436 = pneg %p163
        $region54: #{tpu_custom_call.1} parent=39 // pred_check_branch
          %438 = sbr.rel (%p436) target = $region56
        $region55: #{tpu_custom_call.1} parent=39 // pred_region
          %s439 = sand.u32 %s23, 1
          %s440 = scalar_lea.sflag [#allocation4], %s439
          %s441 = sand.u32 %s153, 1
          %s442 = smul.addr %s441, 8
          %s443 = scalar_lea.vmem [#allocation11], %s442
          %s445 = ssub.s32 128, 128
          %446 = vsyncadd %s440, %s445
          %s447 = smul.addr %s23, 8
          %s448 = smul.addr %s447, 16
          %s449 = scalar_lea.hbm %s5, %s448
          %s451 = sshll.u32 %s443, 4
          %s452 = int_to_ptr.vmem [resolvable:$true] %s451
          %454 = dma.hbm_to_vmem [thread:$0]  %s449, 128, %s452, %s440
        $region56: #{tpu_custom_call.1} parent=39 // pred_fallthru
          _
        // Predicated region
        $region57: #{tpu_custom_call.1} parent=39 // pred_check
          %p455 = pneg %p210
        $region58: #{tpu_custom_call.1} parent=39 // pred_check_branch
          %457 = sbr.rel (%p455) target = $region60
        $region59: #{tpu_custom_call.1} parent=39 // pred_region
          %s458 = sand.u32 %s23, 1
          %s459 = scalar_lea.sflag [#allocation14], %s458
          %s460 = sand.u32 %s200, 1
          %s461 = smul.addr %s460, 16
          %s462 = scalar_lea.vmem [#allocation13], %s461
          %s464 = ssub.s32 256, 256
          %465 = vsyncadd %s459, %s464
          %s466 = smul.addr %s23, 4
          %s467 = smul.addr %s466, 64
          %s468 = scalar_lea.hbm %s7, %s467
          %s469 = sshll.u32 %s462, 4
          %s470 = int_to_ptr.vmem [resolvable:$true] %s469
          %475 = dma.hbm_to_vmem [thread:$0]  %s468, 256, %s470, %s459, 64, 64, 4
        $region60: #{tpu_custom_call.1} parent=39 // pred_fallthru
          _
      $region40: #{tpu_custom_call.1} parent=5 // pred_fallthru
        _
      %p476 = scmp.le.s32.totalorder 1, %s23
      %p477 = scmp.lt.s32.totalorder %s23, 3
      %p478 = pnand %p476, %p477
      %p479 = pneg %p478
      // Predicated region
      $region61: #{tpu_custom_call.1} parent=5 // pred_check
        _
      $region62: #{tpu_custom_call.1} parent=5 // pred_check_branch
        %481 = sbr.rel (%p478) target = $region64
      $region63: #{tpu_custom_call.1} parent=5 // pred_region
        %s482 = ssub.s32 %s23, 1
        // Predicated region
        $region65: #{tpu_custom_call.1} parent=63 // pred_check
          %p483 = pneg %p44
        $region66: #{tpu_custom_call.1} parent=63 // pred_check_branch
          %485 = sbr.rel (%p483) target = $region68
        $region67: #{tpu_custom_call.1} parent=63 // pred_region
          %486 = dma.done [#allocation4], 16
        $region68: #{tpu_custom_call.1} parent=63 // pred_fallthru
          _
        // Predicated region
        $region69: #{tpu_custom_call.1} parent=63 // pred_check
          %p487 = pneg %p65
        $region70: #{tpu_custom_call.1} parent=63 // pred_check_branch
          %489 = sbr.rel (%p487) target = $region72
        $region71: #{tpu_custom_call.1} parent=63 // pred_region
          %490 = dma.done [#allocation7], 128
        $region72: #{tpu_custom_call.1} parent=63 // pred_fallthru
          _
        %s491 = sand.u32 %s28, 1
        %s492 = scalar_lea.sflag [#allocation4], %s491
        %s493 = sand.u32 %s78, 1
        %s494 = smul.addr %s493, 128
        %s495 = scalar_lea.vmem [#allocation8], %s494
        // Predicated region
        $region73: #{tpu_custom_call.1} parent=63 // pred_check
          %p496 = pneg %p91
        $region74: #{tpu_custom_call.1} parent=63 // pred_check_branch
          %498 = sbr.rel (%p496) target = $region76
        $region75: #{tpu_custom_call.1} parent=63 // pred_region
          %499 = dma.done %s492, 2048
        $region76: #{tpu_custom_call.1} parent=63 // pred_fallthru
          _
        %s500 = sand.u32 %s28, 1
        %s501 = scalar_lea.sflag [#allocation4], %s500
        %s502 = sand.u32 %s104, 1
        %s503 = smul.addr %s502, 128
        %s504 = scalar_lea.vmem [#allocation9], %s503
        // Predicated region
        $region77: #{tpu_custom_call.1} parent=63 // pred_check
          %p505 = pneg %p117
        $region78: #{tpu_custom_call.1} parent=63 // pred_check_branch
          %507 = sbr.rel (%p505) target = $region80
        $region79: #{tpu_custom_call.1} parent=63 // pred_region
          %508 = dma.done %s501, 2048
        $region80: #{tpu_custom_call.1} parent=63 // pred_fallthru
          _
        %s509 = sand.u32 %s28, 1
        %s510 = scalar_lea.sflag [#allocation4], %s509
        %s511 = sand.u32 %s130, 1
        %s512 = smul.addr %s511, 8
        %s513 = scalar_lea.vmem [#allocation10], %s512
        // Predicated region
        $region81: #{tpu_custom_call.1} parent=63 // pred_check
          %p514 = pneg %p143
        $region82: #{tpu_custom_call.1} parent=63 // pred_check_branch
          %516 = sbr.rel (%p514) target = $region84
        $region83: #{tpu_custom_call.1} parent=63 // pred_region
          %517 = dma.done %s510, 128
        $region84: #{tpu_custom_call.1} parent=63 // pred_fallthru
          _
        %s518 = sand.u32 %s28, 1
        %s519 = scalar_lea.sflag [#allocation4], %s518
        %s520 = sand.u32 %s156, 1
        %s521 = smul.addr %s520, 8
        %s522 = scalar_lea.vmem [#allocation11], %s521
        // Predicated region
        $region85: #{tpu_custom_call.1} parent=63 // pred_check
          %p523 = pneg %p169
        $region86: #{tpu_custom_call.1} parent=63 // pred_check_branch
          %525 = sbr.rel (%p523) target = $region88
        $region87: #{tpu_custom_call.1} parent=63 // pred_region
          %526 = dma.done %s519, 128
        $region88: #{tpu_custom_call.1} parent=63 // pred_fallthru
          _
        // Predicated region
        $region89: #{tpu_custom_call.1} parent=63 // pred_check
          %p527 = pneg %p190
        $region90: #{tpu_custom_call.1} parent=63 // pred_check_branch
          %529 = sbr.rel (%p527) target = $region92
        $region91: #{tpu_custom_call.1} parent=63 // pred_region
          %530 = dma.done [#allocation7], 256
        $region92: #{tpu_custom_call.1} parent=63 // pred_fallthru
          _
        %s531 = sand.u32 %s28, 1
        %s532 = scalar_lea.sflag [#allocation14], %s531
        %s533 = sand.u32 %s203, 1
        %s534 = smul.addr %s533, 16
        %s535 = scalar_lea.vmem [#allocation13], %s534
        // Predicated region
        $region93: #{tpu_custom_call.1} parent=63 // pred_check
          %p536 = pneg %p216
        $region94: #{tpu_custom_call.1} parent=63 // pred_check_branch
          %538 = sbr.rel (%p536) target = $region96
        $region95: #{tpu_custom_call.1} parent=63 // pred_region
          %539 = dma.done %s532, 256
        $region96: #{tpu_custom_call.1} parent=63 // pred_fallthru
          _
        // Predicated region
        $region97: #{tpu_custom_call.1} parent=63 // pred_check
          %p540 = pneg %p258
        $region98: #{tpu_custom_call.1} parent=63 // pred_check_branch
          %542 = sbr.rel (%p540) target = $region100
        $region99: #{tpu_custom_call.1} parent=63 // pred_region
          %543 = dma.done [#allocation14], 512
        $region100: #{tpu_custom_call.1} parent=63 // pred_fallthru
          _
        %p544 = pneg %p44
        %p545 = pneg %p41
        %p546 = pneg %p65
        %p547 = pneg %p62
        %s548 = sand.u32 %s28, 1
        %s549 = scalar_lea.sflag [#allocation4], %s548
        %s550 = sand.u32 %s78, 1
        %s551 = smul.addr %s550, 128
        %s552 = scalar_lea.vmem [#allocation8], %s551
        %p553 = pneg %p91
        %p554 = pneg %p88
        %s555 = sand.u32 %s28, 1
        %s556 = scalar_lea.sflag [#allocation4], %s555
        %s557 = sand.u32 %s104, 1
        %s558 = smul.addr %s557, 128
        %s559 = scalar_lea.vmem [#allocation9], %s558
        %p560 = pneg %p117
        %p561 = pneg %p114
        %s562 = sand.u32 %s28, 1
        %s563 = scalar_lea.sflag [#allocation4], %s562
        %s564 = sand.u32 %s130, 1
        %s565 = smul.addr %s564, 8
        %s566 = scalar_lea.vmem [#allocation10], %s565
        %p567 = pneg %p143
        %p568 = pneg %p140
        %s569 = sand.u32 %s28, 1
        %s570 = scalar_lea.sflag [#allocation4], %s569
        %s571 = sand.u32 %s156, 1
        %s572 = smul.addr %s571, 8
        %s573 = scalar_lea.vmem [#allocation11], %s572
        %p574 = pneg %p169
        %p575 = pneg %p166
        %p576 = pneg %p190
        %p577 = pneg %p187
        %s578 = sand.u32 %s28, 1
        %s579 = scalar_lea.sflag [#allocation14], %s578
        %s580 = sand.u32 %s203, 1
        %s581 = smul.addr %s580, 16
        %s582 = scalar_lea.vmem [#allocation13], %s581
        %p583 = pneg %p216
        %p584 = pneg %p213
        %p585 = pneg %p237
        %p586 = pneg %p234
        %p587 = pneg %p258
        %p588 = pneg %p255
        %p589 = pneg %p279
        %p590 = pneg %p276
        %p591 = pneg %p300
        %p592 = pneg %p297
        %v594 = vld [vmem:[#allocation3] sm:$0x1]
        %v595 = vld [vmem:[#allocation6] sm:$0xf]
        %v596 = vld [vmem:[#allocation6 + $0x4] sm:$0xf]
        %p597 = scmp.eq.s32.totalorder %s28, 0
        // Predicated region
        $region101: #{tpu_custom_call.1} parent=63 // pred_check
          %p598 = pneg %p597
        $region102: #{tpu_custom_call.1} parent=63 // pred_check_branch
          %600 = sbr.rel (%p598) target = $region104
        $region103: #{tpu_custom_call.1} parent=63 // pred_region
          %v601 = vld [vmem:[#allocation12] sm:$0xf]
          %v602 = vld [vmem:[#allocation12 + $0x4] sm:$0xf]
          %v603 = vld [vmem:[#allocation12 + $0x8] sm:$0xf]
          %v604 = vld [vmem:[#allocation12 + $0xc] sm:$0xf]
          %v605 = vld [vmem:[%s8] sm:$0x1]
          %v607 = vlaneseq
          %v608 = vshrl.u32 %v607, 7
          %v609 = vsub.s32 0, %v608
          %v610 = vrot.slane %v605, %v609
          %v616 = vunpack.c.l.b16 %v601
          %v617 = vunpack.c.l.b16 %v602
          %v618 = vunpack.c.l.b16 %v603
          %v619 = vunpack.c.l.b16 %v604
          %v620 = vpack.c.b16 %v617, %v616
          %v621 = vpack.c.b16 %v619, %v618
          %vm624 = vcmask 261120
          %v626 = vsel %vm624, %v594, 0
          %628 = vmatprep.subr.bf16.mxu0 0
          %629 = vmatpush1.bf16.msra.mxu0 0
          %630 = vmatprep.subr.bf16.mxu0 0
          %631 = vmatpush1.bf16.msra.mxu0 0
          %632 = vmatprep.subr.bf16.mxu0 0
          %633 = vmatpush1.bf16.msra.mxu0 0
          %634 = vmatprep.subr.bf16.mxu0 0
          %635 = vmatpush1.bf16.msra.mxu0 0
          %636 = vmatprep.subr.bf16.mxu0 0
          %637 = vmatpush1.bf16.msra.mxu0 0
          %638 = vmatprep.subr.bf16.mxu0 0
          %639 = vmatpush1.bf16.msra.mxu0 0
          %640 = vmatprep.subr.bf16.mxu0 0
          %641 = vmatpush1.bf16.msra.mxu0 %v621
          %642 = vmatprep.subr.bf16.mxu0 0
          %643 = vmatpush1.bf16.msra.mxu0 %v620
          %644 = vmatprep.subr.bf16.mxu0 0
          %645 = vmatpush2.bf16.msra.mxu0 0
          %646 = vmatprep.subr.bf16.mxu0 0
          %647 = vmatpush2.bf16.msra.mxu0 0
          %648 = vmatprep.subr.bf16.mxu0 0
          %649 = vmatpush2.bf16.msra.mxu0 0
          %650 = vmatprep.subr.bf16.mxu0 0
          %651 = vmatpush2.bf16.msra.mxu0 0
          %652 = vmatprep.subr.bf16.mxu0 0
          %653 = vmatpush2.bf16.msra.mxu0 0
          %654 = vmatprep.subr.bf16.mxu0 0
          %655 = vmatpush2.bf16.msra.mxu0 0
          %656 = vmatprep.subr.bf16.mxu0 0
          %657 = vmatpush2.bf16.msra.mxu0 0
          %658 = vmatprep.subr.bf16.mxu0 0
          %659 = vmatpush2.bf16.msra.mxu0 0
          %660 = vmatprep.mubr.bf16.mxu0 0
          %661 = vmatmul.mubr.bf16.gmra.mxu0 %v626
          %v662 = vpop.f32.mrf.mxu0
          %v663 = vadd.f32 %v610, %v662
          %v664 = vpop.f32.mrf.mxu0
          %v665 = vpop.f32.mrf.mxu0
          %v666 = vpop.f32.mrf.mxu0
          %667 = vdwg.mxu0
          %vm668 = vcmask 517120
          %669 = vst.msk [vmem:[#allocation2] sm:$0x3] %vm668, %v663
        $region104: #{tpu_custom_call.1} parent=63 // pred_fallthru
          _
        %v670 = vld [vmem:[%s495] sm:$0xff]
        %v671 = vld [vmem:[%s495 + $0x8] sm:$0xff]
        %v672 = vld [vmem:[%s495 + $0x10] sm:$0xff]
        %v673 = vld [vmem:[%s495 + $0x18] sm:$0xff]
        %v674 = vld [vmem:[%s495 + $0x20] sm:$0xff]
        %v675 = vld [vmem:[%s495 + $0x28] sm:$0xff]
        %v676 = vld [vmem:[%s495 + $0x30] sm:$0xff]
        %v677 = vld [vmem:[%s495 + $0x38] sm:$0xff]
        %v678 = vld [vmem:[%s495 + $0x40] sm:$0xff]
        %v679 = vld [vmem:[%s495 + $0x48] sm:$0xff]
        %v680 = vld [vmem:[%s495 + $0x50] sm:$0xff]
        %v681 = vld [vmem:[%s495 + $0x58] sm:$0xff]
        %v682 = vld [vmem:[%s495 + $0x60] sm:$0xff]
        %v683 = vld [vmem:[%s495 + $0x68] sm:$0xff]
        %v684 = vld [vmem:[%s495 + $0x70] sm:$0xff]
        %v685 = vld [vmem:[%s495 + $0x78] sm:$0xff]
        %v688 = vunpack.c.l.b16 %v595
        %v689 = vunpack.c.l.b16 %v596
        %v690 = vpack.c.b16 %v689, %v688
        %v707 = vunpack.c.l.b16 %v670
        %v708 = vunpack.c.h.b16 %v670
        %v709 = vunpack.c.l.b16 %v671
        %v710 = vunpack.c.h.b16 %v671
        %v711 = vunpack.c.l.b16 %v672
        %v712 = vunpack.c.h.b16 %v672
        %v713 = vunpack.c.l.b16 %v673
        %v714 = vunpack.c.h.b16 %v673
        %v715 = vunpack.c.l.b16 %v674
        %v716 = vunpack.c.h.b16 %v674
        %v717 = vunpack.c.l.b16 %v675
        %v718 = vunpack.c.h.b16 %v675
        %v719 = vunpack.c.l.b16 %v676
        %v720 = vunpack.c.h.b16 %v676
        %v721 = vunpack.c.l.b16 %v677
        %v722 = vunpack.c.h.b16 %v677
        %v723 = vunpack.c.l.b16 %v678
        %v724 = vunpack.c.h.b16 %v678
        %v725 = vunpack.c.l.b16 %v679
        %v726 = vunpack.c.h.b16 %v679
        %v727 = vunpack.c.l.b16 %v680
        %v728 = vunpack.c.h.b16 %v680
        %v729 = vunpack.c.l.b16 %v681
        %v730 = vunpack.c.h.b16 %v681
        %v731 = vunpack.c.l.b16 %v682
        %v732 = vunpack.c.h.b16 %v682
        %v733 = vunpack.c.l.b16 %v683
        %v734 = vunpack.c.h.b16 %v683
        %v735 = vunpack.c.l.b16 %v684
        %v736 = vunpack.c.h.b16 %v684
        %v737 = vunpack.c.l.b16 %v685
        %v738 = vunpack.c.h.b16 %v685
        %v739 = vpack.c.b16 %v715, %v707
        %v740 = vpack.c.b16 %v716, %v708
        %v741 = vpack.c.b16 %v717, %v709
        %v742 = vpack.c.b16 %v718, %v710
        %v743 = vpack.c.b16 %v719, %v711
        %v744 = vpack.c.b16 %v720, %v712
        %v745 = vpack.c.b16 %v721, %v713
        %v746 = vpack.c.b16 %v722, %v714
        %v747 = vpack.c.b16 %v731, %v723
        %v748 = vpack.c.b16 %v732, %v724
        %v749 = vpack.c.b16 %v733, %v725
        %v750 = vpack.c.b16 %v734, %v726
        %v751 = vpack.c.b16 %v735, %v727
        %v752 = vpack.c.b16 %v736, %v728
        %v753 = vpack.c.b16 %v737, %v729
        %v754 = vpack.c.b16 %v738, %v730
        %vm771 = vcmask 261120
        %v773 = vsel %vm771, %v690, 0
        %775 = vmatprep.subr.bf16.mxu0 0
        %776 = vmatpush1.bf16.msra.mxu0 0
        %777 = vmatprep.subr.bf16.mxu0 0
        %778 = vmatpush1.bf16.msra.mxu0 0
        %779 = vmatprep.subr.bf16.mxu0 0
        %780 = vmatpush1.bf16.msra.mxu0 0
        %781 = vmatprep.subr.bf16.mxu0 0
        %782 = vmatpush1.bf16.msra.mxu0 0
        %783 = vmatprep.subr.bf16.mxu0 0
        %784 = vmatpush1.bf16.msra.mxu0 0
        %785 = vmatprep.subr.bf16.mxu0 0
        %786 = vmatpush1.bf16.msra.mxu0 0
        %787 = vmatprep.subr.bf16.mxu0 %v748
        %788 = vmatpush1.bf16.msra.mxu0 %v747
        %789 = vmatprep.subr.bf16.mxu0 %v740
        %790 = vmatpush1.bf16.msra.mxu0 %v739
        %791 = vmatprep.subr.bf16.mxu0 0
        %792 = vmatpush2.bf16.msra.mxu0 0
        %793 = vmatprep.subr.bf16.mxu0 0
        %794 = vmatpush2.bf16.msra.mxu0 0
        %795 = vmatprep.subr.bf16.mxu0 0
        %796 = vmatpush2.bf16.msra.mxu0 0
        %797 = vmatprep.subr.bf16.mxu0 0
        %798 = vmatpush2.bf16.msra.mxu0 0
        %799 = vmatprep.subr.bf16.mxu0 0
        %800 = vmatpush2.bf16.msra.mxu0 0
        %801 = vmatprep.subr.bf16.mxu0 0
        %802 = vmatpush2.bf16.msra.mxu0 0
        %803 = vmatprep.subr.bf16.mxu0 0
        %804 = vmatpush2.bf16.msra.mxu0 0
        %805 = vmatprep.subr.bf16.mxu0 0
        %806 = vmatpush2.bf16.msra.mxu0 0
        %807 = vmatprep.mubr.bf16.mxu0 0
        %808 = vmatmul.mubr.bf16.gmra.mxu0 %v773
        %v809 = vpop.f32.mrf.mxu0
        %v810 = vadd.f32 0.0, %v809
        %v811 = vpop.f32.mrf.mxu0
        %v812 = vadd.f32 0.0, %v811
        %v813 = vpop.f32.mrf.mxu0
        %v814 = vadd.f32 0.0, %v813
        %v815 = vpop.f32.mrf.mxu0
        %v816 = vadd.f32 0.0, %v815
        %817 = vdwg.mxu0
        %818 = vmatprep.subr.bf16.mxu0 0
        %819 = vmatpush1.bf16.msra.mxu0 0
        %820 = vmatprep.subr.bf16.mxu0 0
        %821 = vmatpush1.bf16.msra.mxu0 0
        %822 = vmatprep.subr.bf16.mxu0 0
        %823 = vmatpush1.bf16.msra.mxu0 0
        %824 = vmatprep.subr.bf16.mxu0 0
        %825 = vmatpush1.bf16.msra.mxu0 0
        %826 = vmatprep.subr.bf16.mxu0 0
        %827 = vmatpush1.bf16.msra.mxu0 0
        %828 = vmatprep.subr.bf16.mxu0 0
        %829 = vmatpush1.bf16.msra.mxu0 0
        %830 = vmatprep.subr.bf16.mxu0 %v750
        %831 = vmatpush1.bf16.msra.mxu0 %v749
        %832 = vmatprep.subr.bf16.mxu0 %v742
        %833 = vmatpush1.bf16.msra.mxu0 %v741
        %834 = vmatprep.subr.bf16.mxu0 0
        %835 = vmatpush2.bf16.msra.mxu0 0
        %836 = vmatprep.subr.bf16.mxu0 0
        %837 = vmatpush2.bf16.msra.mxu0 0
        %838 = vmatprep.subr.bf16.mxu0 0
        %839 = vmatpush2.bf16.msra.mxu0 0
        %840 = vmatprep.subr.bf16.mxu0 0
        %841 = vmatpush2.bf16.msra.mxu0 0
        %842 = vmatprep.subr.bf16.mxu0 0
        %843 = vmatpush2.bf16.msra.mxu0 0
        %844 = vmatprep.subr.bf16.mxu0 0
        %845 = vmatpush2.bf16.msra.mxu0 0
        %846 = vmatprep.subr.bf16.mxu0 0
        %847 = vmatpush2.bf16.msra.mxu0 0
        %848 = vmatprep.subr.bf16.mxu0 0
        %849 = vmatpush2.bf16.msra.mxu0 0
        %850 = vmatprep.mubr.bf16.mxu0 0
        %851 = vmatmul.mubr.bf16.gmra.mxu0 %v773
        %v852 = vpop.f32.mrf.mxu0
        %v853 = vadd.f32 0.0, %v852
        %v854 = vpop.f32.mrf.mxu0
        %v855 = vadd.f32 0.0, %v854
        %v856 = vpop.f32.mrf.mxu0
        %v857 = vadd.f32 0.0, %v856
        %v858 = vpop.f32.mrf.mxu0
        %v859 = vadd.f32 0.0, %v858
        %860 = vdwg.mxu0
        %861 = vmatprep.subr.bf16.mxu0 0
        %862 = vmatpush1.bf16.msra.mxu0 0
        %863 = vmatprep.subr.bf16.mxu0 0
        %864 = vmatpush1.bf16.msra.mxu0 0
        %865 = vmatprep.subr.bf16.mxu0 0
        %866 = vmatpush1.bf16.msra.mxu0 0
        %867 = vmatprep.subr.bf16.mxu0 0
        %868 = vmatpush1.bf16.msra.mxu0 0
        %869 = vmatprep.subr.bf16.mxu0 0
        %870 = vmatpush1.bf16.msra.mxu0 0
        %871 = vmatprep.subr.bf16.mxu0 0
        %872 = vmatpush1.bf16.msra.mxu0 0
        %873 = vmatprep.subr.bf16.mxu0 %v752
        %874 = vmatpush1.bf16.msra.mxu0 %v751
        %875 = vmatprep.subr.bf16.mxu0 %v744
        %876 = vmatpush1.bf16.msra.mxu0 %v743
        %877 = vmatprep.subr.bf16.mxu0 0
        %878 = vmatpush2.bf16.msra.mxu0 0
        %879 = vmatprep.subr.bf16.mxu0 0
        %880 = vmatpush2.bf16.msra.mxu0 0
        %881 = vmatprep.subr.bf16.mxu0 0
        %882 = vmatpush2.bf16.msra.mxu0 0
        %883 = vmatprep.subr.bf16.mxu0 0
        %884 = vmatpush2.bf16.msra.mxu0 0
        %885 = vmatprep.subr.bf16.mxu0 0
        %886 = vmatpush2.bf16.msra.mxu0 0
        %887 = vmatprep.subr.bf16.mxu0 0
        %888 = vmatpush2.bf16.msra.mxu0 0
        %889 = vmatprep.subr.bf16.mxu0 0
        %890 = vmatpush2.bf16.msra.mxu0 0
        %891 = vmatprep.subr.bf16.mxu0 0
        %892 = vmatpush2.bf16.msra.mxu0 0
        %893 = vmatprep.mubr.bf16.mxu0 0
        %894 = vmatmul.mubr.bf16.gmra.mxu0 %v773
        %v895 = vpop.f32.mrf.mxu0
        %v896 = vadd.f32 0.0, %v895
        %v897 = vpop.f32.mrf.mxu0
        %v898 = vadd.f32 0.0, %v897
        %v899 = vpop.f32.mrf.mxu0
        %v900 = vadd.f32 0.0, %v899
        %v901 = vpop.f32.mrf.mxu0
        %v902 = vadd.f32 0.0, %v901
        %903 = vdwg.mxu0
        %904 = vmatprep.subr.bf16.mxu0 0
        %905 = vmatpush1.bf16.msra.mxu0 0
        %906 = vmatprep.subr.bf16.mxu0 0
        %907 = vmatpush1.bf16.msra.mxu0 0
        %908 = vmatprep.subr.bf16.mxu0 0
        %909 = vmatpush1.bf16.msra.mxu0 0
        %910 = vmatprep.subr.bf16.mxu0 0
        %911 = vmatpush1.bf16.msra.mxu0 0
        %912 = vmatprep.subr.bf16.mxu0 0
        %913 = vmatpush1.bf16.msra.mxu0 0
        %914 = vmatprep.subr.bf16.mxu0 0
        %915 = vmatpush1.bf16.msra.mxu0 0
        %916 = vmatprep.subr.bf16.mxu0 %v754
        %917 = vmatpush1.bf16.msra.mxu0 %v753
        %918 = vmatprep.subr.bf16.mxu0 %v746
        %919 = vmatpush1.bf16.msra.mxu0 %v745
        %920 = vmatprep.subr.bf16.mxu0 0
        %921 = vmatpush2.bf16.msra.mxu0 0
        %922 = vmatprep.subr.bf16.mxu0 0
        %923 = vmatpush2.bf16.msra.mxu0 0
        %924 = vmatprep.subr.bf16.mxu0 0
        %925 = vmatpush2.bf16.msra.mxu0 0
        %926 = vmatprep.subr.bf16.mxu0 0
        %927 = vmatpush2.bf16.msra.mxu0 0
        %928 = vmatprep.subr.bf16.mxu0 0
        %929 = vmatpush2.bf16.msra.mxu0 0
        %930 = vmatprep.subr.bf16.mxu0 0
        %931 = vmatpush2.bf16.msra.mxu0 0
        %932 = vmatprep.subr.bf16.mxu0 0
        %933 = vmatpush2.bf16.msra.mxu0 0
        %934 = vmatprep.subr.bf16.mxu0 0
        %935 = vmatpush2.bf16.msra.mxu0 0
        %936 = vmatprep.mubr.bf16.mxu0 0
        %937 = vmatmul.mubr.bf16.gmra.mxu0 %v773
        %v938 = vpop.f32.mrf.mxu0
        %v939 = vadd.f32 0.0, %v938
        %v940 = vpop.f32.mrf.mxu0
        %v941 = vadd.f32 0.0, %v940
        %v942 = vpop.f32.mrf.mxu0
        %v943 = vadd.f32 0.0, %v942
        %v944 = vpop.f32.mrf.mxu0
        %v945 = vadd.f32 0.0, %v944
        %946 = vdwg.mxu0
        %v947 = vld [vmem:[%s504] sm:$0xff]
        %v948 = vld [vmem:[%s504 + $0x8] sm:$0xff]
        %v949 = vld [vmem:[%s504 + $0x10] sm:$0xff]
        %v950 = vld [vmem:[%s504 + $0x18] sm:$0xff]
        %v951 = vld [vmem:[%s504 + $0x20] sm:$0xff]
        %v952 = vld [vmem:[%s504 + $0x28] sm:$0xff]
        %v953 = vld [vmem:[%s504 + $0x30] sm:$0xff]
        %v954 = vld [vmem:[%s504 + $0x38] sm:$0xff]
        %v955 = vld [vmem:[%s504 + $0x40] sm:$0xff]
        %v956 = vld [vmem:[%s504 + $0x48] sm:$0xff]
        %v957 = vld [vmem:[%s504 + $0x50] sm:$0xff]
        %v958 = vld [vmem:[%s504 + $0x58] sm:$0xff]
        %v959 = vld [vmem:[%s504 + $0x60] sm:$0xff]
        %v960 = vld [vmem:[%s504 + $0x68] sm:$0xff]
        %v961 = vld [vmem:[%s504 + $0x70] sm:$0xff]
        %v962 = vld [vmem:[%s504 + $0x78] sm:$0xff]
        %v979 = vunpack.c.l.b16 %v947
        %v980 = vunpack.c.h.b16 %v947
        %v981 = vunpack.c.l.b16 %v948
        %v982 = vunpack.c.h.b16 %v948
        %v983 = vunpack.c.l.b16 %v949
        %v984 = vunpack.c.h.b16 %v949
        %v985 = vunpack.c.l.b16 %v950
        %v986 = vunpack.c.h.b16 %v950
        %v987 = vunpack.c.l.b16 %v951
        %v988 = vunpack.c.h.b16 %v951
        %v989 = vunpack.c.l.b16 %v952
        %v990 = vunpack.c.h.b16 %v952
        %v991 = vunpack.c.l.b16 %v953
        %v992 = vunpack.c.h.b16 %v953
        %v993 = vunpack.c.l.b16 %v954
        %v994 = vunpack.c.h.b16 %v954
        %v995 = vunpack.c.l.b16 %v955
        %v996 = vunpack.c.h.b16 %v955
        %v997 = vunpack.c.l.b16 %v956
        %v998 = vunpack.c.h.b16 %v956
        %v999 = vunpack.c.l.b16 %v957
        %v1000 = vunpack.c.h.b16 %v957
        %v1001 = vunpack.c.l.b16 %v958
        %v1002 = vunpack.c.h.b16 %v958
        %v1003 = vunpack.c.l.b16 %v959
        %v1004 = vunpack.c.h.b16 %v959
        %v1005 = vunpack.c.l.b16 %v960
        %v1006 = vunpack.c.h.b16 %v960
        %v1007 = vunpack.c.l.b16 %v961
        %v1008 = vunpack.c.h.b16 %v961
        %v1009 = vunpack.c.l.b16 %v962
        %v1010 = vunpack.c.h.b16 %v962
        %v1011 = vpack.c.b16 %v987, %v979
        %v1012 = vpack.c.b16 %v988, %v980
        %v1013 = vpack.c.b16 %v989, %v981
        %v1014 = vpack.c.b16 %v990, %v982
        %v1015 = vpack.c.b16 %v991, %v983
        %v1016 = vpack.c.b16 %v992, %v984
        %v1017 = vpack.c.b16 %v993, %v985
        %v1018 = vpack.c.b16 %v994, %v986
        %v1019 = vpack.c.b16 %v1003, %v995
        %v1020 = vpack.c.b16 %v1004, %v996
        %v1021 = vpack.c.b16 %v1005, %v997
        %v1022 = vpack.c.b16 %v1006, %v998
        %v1023 = vpack.c.b16 %v1007, %v999
        %v1024 = vpack.c.b16 %v1008, %v1000
        %v1025 = vpack.c.b16 %v1009, %v1001
        %v1026 = vpack.c.b16 %v1010, %v1002
        %v1044 = vsel %vm771, %v594, 0
        %1046 = vmatprep.subr.bf16.mxu0 0
        %1047 = vmatpush1.bf16.msra.mxu0 0
        %1048 = vmatprep.subr.bf16.mxu0 0
        %1049 = vmatpush1.bf16.msra.mxu0 0
        %1050 = vmatprep.subr.bf16.mxu0 0
        %1051 = vmatpush1.bf16.msra.mxu0 0
        %1052 = vmatprep.subr.bf16.mxu0 0
        %1053 = vmatpush1.bf16.msra.mxu0 0
        %1054 = vmatprep.subr.bf16.mxu0 0
        %1055 = vmatpush1.bf16.msra.mxu0 0
        %1056 = vmatprep.subr.bf16.mxu0 0
        %1057 = vmatpush1.bf16.msra.mxu0 0
        %1058 = vmatprep.subr.bf16.mxu0 %v1020
        %1059 = vmatpush1.bf16.msra.mxu0 %v1019
        %1060 = vmatprep.subr.bf16.mxu0 %v1012
        %1061 = vmatpush1.bf16.msra.mxu0 %v1011
        %1062 = vmatprep.subr.bf16.mxu0 0
        %1063 = vmatpush2.bf16.msra.mxu0 0
        %1064 = vmatprep.subr.bf16.mxu0 0
        %1065 = vmatpush2.bf16.msra.mxu0 0
        %1066 = vmatprep.subr.bf16.mxu0 0
        %1067 = vmatpush2.bf16.msra.mxu0 0
        %1068 = vmatprep.subr.bf16.mxu0 0
        %1069 = vmatpush2.bf16.msra.mxu0 0
        %1070 = vmatprep.subr.bf16.mxu0 0
        %1071 = vmatpush2.bf16.msra.mxu0 0
        %1072 = vmatprep.subr.bf16.mxu0 0
        %1073 = vmatpush2.bf16.msra.mxu0 0
        %1074 = vmatprep.subr.bf16.mxu0 0
        %1075 = vmatpush2.bf16.msra.mxu0 0
        %1076 = vmatprep.subr.bf16.mxu0 0
        %1077 = vmatpush2.bf16.msra.mxu0 0
        %1078 = vmatprep.mubr.bf16.mxu0 0
        %1079 = vmatmul.mubr.bf16.gmra.mxu0 %v1044
        %v1080 = vpop.f32.mrf.mxu0
        %v1081 = vadd.f32 0.0, %v1080
        %v1082 = vpop.f32.mrf.mxu0
        %v1083 = vadd.f32 0.0, %v1082
        %v1084 = vpop.f32.mrf.mxu0
        %v1085 = vpop.f32.mrf.mxu0
        %1086 = vdwg.mxu0
        %1087 = vmatprep.subr.bf16.mxu0 0
        %1088 = vmatpush1.bf16.msra.mxu0 0
        %1089 = vmatprep.subr.bf16.mxu0 0
        %1090 = vmatpush1.bf16.msra.mxu0 0
        %1091 = vmatprep.subr.bf16.mxu0 0
        %1092 = vmatpush1.bf16.msra.mxu0 0
        %1093 = vmatprep.subr.bf16.mxu0 0
        %1094 = vmatpush1.bf16.msra.mxu0 0
        %1095 = vmatprep.subr.bf16.mxu0 0
        %1096 = vmatpush1.bf16.msra.mxu0 0
        %1097 = vmatprep.subr.bf16.mxu0 0
        %1098 = vmatpush1.bf16.msra.mxu0 0
        %1099 = vmatprep.subr.bf16.mxu0 %v1022
        %1100 = vmatpush1.bf16.msra.mxu0 %v1021
        %1101 = vmatprep.subr.bf16.mxu0 %v1014
        %1102 = vmatpush1.bf16.msra.mxu0 %v1013
        %1103 = vmatprep.subr.bf16.mxu0 0
        %1104 = vmatpush2.bf16.msra.mxu0 0
        %1105 = vmatprep.subr.bf16.mxu0 0
        %1106 = vmatpush2.bf16.msra.mxu0 0
        %1107 = vmatprep.subr.bf16.mxu0 0
        %1108 = vmatpush2.bf16.msra.mxu0 0
        %1109 = vmatprep.subr.bf16.mxu0 0
        %1110 = vmatpush2.bf16.msra.mxu0 0
        %1111 = vmatprep.subr.bf16.mxu0 0
        %1112 = vmatpush2.bf16.msra.mxu0 0
        %1113 = vmatprep.subr.bf16.mxu0 0
        %1114 = vmatpush2.bf16.msra.mxu0 0
        %1115 = vmatprep.subr.bf16.mxu0 0
        %1116 = vmatpush2.bf16.msra.mxu0 0
        %1117 = vmatprep.subr.bf16.mxu0 0
        %1118 = vmatpush2.bf16.msra.mxu0 0
        %1119 = vmatprep.mubr.bf16.mxu0 0
        %1120 = vmatmul.mubr.bf16.gmra.mxu0 %v1044
        %v1121 = vpop.f32.mrf.mxu0
        %v1122 = vadd.f32 0.0, %v1121
        %v1123 = vpop.f32.mrf.mxu0
        %v1124 = vadd.f32 0.0, %v1123
        %v1125 = vpop.f32.mrf.mxu0
        %v1126 = vpop.f32.mrf.mxu0
        %1127 = vdwg.mxu0
        %1128 = vmatprep.subr.bf16.mxu0 0
        %1129 = vmatpush1.bf16.msra.mxu0 0
        %1130 = vmatprep.subr.bf16.mxu0 0
        %1131 = vmatpush1.bf16.msra.mxu0 0
        %1132 = vmatprep.subr.bf16.mxu0 0
        %1133 = vmatpush1.bf16.msra.mxu0 0
        %1134 = vmatprep.subr.bf16.mxu0 0
        %1135 = vmatpush1.bf16.msra.mxu0 0
        %1136 = vmatprep.subr.bf16.mxu0 0
        %1137 = vmatpush1.bf16.msra.mxu0 0
        %1138 = vmatprep.subr.bf16.mxu0 0
        %1139 = vmatpush1.bf16.msra.mxu0 0
        %1140 = vmatprep.subr.bf16.mxu0 %v1024
        %1141 = vmatpush1.bf16.msra.mxu0 %v1023
        %1142 = vmatprep.subr.bf16.mxu0 %v1016
        %1143 = vmatpush1.bf16.msra.mxu0 %v1015
        %1144 = vmatprep.subr.bf16.mxu0 0
        %1145 = vmatpush2.bf16.msra.mxu0 0
        %1146 = vmatprep.subr.bf16.mxu0 0
        %1147 = vmatpush2.bf16.msra.mxu0 0
        %1148 = vmatprep.subr.bf16.mxu0 0
        %1149 = vmatpush2.bf16.msra.mxu0 0
        %1150 = vmatprep.subr.bf16.mxu0 0
        %1151 = vmatpush2.bf16.msra.mxu0 0
        %1152 = vmatprep.subr.bf16.mxu0 0
        %1153 = vmatpush2.bf16.msra.mxu0 0
        %1154 = vmatprep.subr.bf16.mxu0 0
        %1155 = vmatpush2.bf16.msra.mxu0 0
        %1156 = vmatprep.subr.bf16.mxu0 0
        %1157 = vmatpush2.bf16.msra.mxu0 0
        %1158 = vmatprep.subr.bf16.mxu0 0
        %1159 = vmatpush2.bf16.msra.mxu0 0
        %1160 = vmatprep.mubr.bf16.mxu0 0
        %1161 = vmatmul.mubr.bf16.gmra.mxu0 %v1044
        %v1162 = vpop.f32.mrf.mxu0
        %v1163 = vadd.f32 0.0, %v1162
        %v1164 = vpop.f32.mrf.mxu0
        %v1165 = vadd.f32 0.0, %v1164
        %v1166 = vpop.f32.mrf.mxu0
        %v1167 = vpop.f32.mrf.mxu0
        %1168 = vdwg.mxu0
        %1169 = vmatprep.subr.bf16.mxu0 0
        %1170 = vmatpush1.bf16.msra.mxu0 0
        %1171 = vmatprep.subr.bf16.mxu0 0
        %1172 = vmatpush1.bf16.msra.mxu0 0
        %1173 = vmatprep.subr.bf16.mxu0 0
        %1174 = vmatpush1.bf16.msra.mxu0 0
        %1175 = vmatprep.subr.bf16.mxu0 0
        %1176 = vmatpush1.bf16.msra.mxu0 0
        %1177 = vmatprep.subr.bf16.mxu0 0
        %1178 = vmatpush1.bf16.msra.mxu0 0
        %1179 = vmatprep.subr.bf16.mxu0 0
        %1180 = vmatpush1.bf16.msra.mxu0 0
        %1181 = vmatprep.subr.bf16.mxu0 %v1026
        %1182 = vmatpush1.bf16.msra.mxu0 %v1025
        %1183 = vmatprep.subr.bf16.mxu0 %v1018
        %1184 = vmatpush1.bf16.msra.mxu0 %v1017
        %1185 = vmatprep.subr.bf16.mxu0 0
        %1186 = vmatpush2.bf16.msra.mxu0 0
        %1187 = vmatprep.subr.bf16.mxu0 0
        %1188 = vmatpush2.bf16.msra.mxu0 0
        %1189 = vmatprep.subr.bf16.mxu0 0
        %1190 = vmatpush2.bf16.msra.mxu0 0
        %1191 = vmatprep.subr.bf16.mxu0 0
        %1192 = vmatpush2.bf16.msra.mxu0 0
        %1193 = vmatprep.subr.bf16.mxu0 0
        %1194 = vmatpush2.bf16.msra.mxu0 0
        %1195 = vmatprep.subr.bf16.mxu0 0
        %1196 = vmatpush2.bf16.msra.mxu0 0
        %1197 = vmatprep.subr.bf16.mxu0 0
        %1198 = vmatpush2.bf16.msra.mxu0 0
        %1199 = vmatprep.subr.bf16.mxu0 0
        %1200 = vmatpush2.bf16.msra.mxu0 0
        %1201 = vmatprep.mubr.bf16.mxu0 0
        %1202 = vmatmul.mubr.bf16.gmra.mxu0 %v1044
        %v1203 = vpop.f32.mrf.mxu0
        %v1204 = vadd.f32 0.0, %v1203
        %v1205 = vpop.f32.mrf.mxu0
        %v1206 = vadd.f32 0.0, %v1205
        %v1207 = vpop.f32.mrf.mxu0
        %v1208 = vpop.f32.mrf.mxu0
        %1209 = vdwg.mxu0
        %v1218 = vcombine.low %v1081, %v1083
        %v1219 = vcombine.low %v1122, %v1124
        %v1220 = vcombine.low %v1163, %v1165
        %v1221 = vcombine.low %v1204, %v1206
        %v1223 = vunpack.c.l.s4 1966171168
        %v1224 = vunpack.c.0.s8 %v1223
        %v1225 = vlaneseq
        %v1226 = vshrl.u32 %v1225, 7
        %v1227 = vsub.s32 %v1224, %v1226
        %v1228 = vrot.slane %v1218, %v1227
        %v1230 = vunpack.c.l.s4 1966171168
        %v1231 = vunpack.c.0.s8 %v1230
        %v1232 = vlaneseq
        %v1233 = vshrl.u32 %v1232, 7
        %v1234 = vsub.s32 %v1231, %v1233
        %v1235 = vrot.slane %v1219, %v1234
        %v1237 = vunpack.c.l.s4 1966171168
        %v1238 = vunpack.c.0.s8 %v1237
        %v1239 = vlaneseq
        %v1240 = vshrl.u32 %v1239, 7
        %v1241 = vsub.s32 %v1238, %v1240
        %v1242 = vrot.slane %v1220, %v1241
        %v1244 = vunpack.c.l.s4 1966171168
        %v1245 = vunpack.c.0.s8 %v1244
        %v1246 = vlaneseq
        %v1247 = vshrl.u32 %v1246, 7
        %v1248 = vsub.s32 %v1245, %v1247
        %v1249 = vrot.slane %v1221, %v1248
        %v1250 = vcombine.low %v1228, %v1235
        %v1251 = vcombine.high %v1228, %v1235
        %v1252 = vcombine.low %v1242, %v1249
        %v1253 = vcombine.high %v1242, %v1249
        %v1255 = vunpack.c.l.s4 1966171168
        %v1256 = vunpack.c.0.s8 %v1255
        %v1257 = vlaneseq
        %v1258 = vshrl.u32 %v1257, 7
        %v1259 = vsub.s32 %v1256, %v1258
        %v1260 = vrot.slane %v1250, %v1259
        %v1262 = vunpack.c.l.s4 1966171168
        %v1263 = vunpack.c.0.s8 %v1262
        %v1264 = vlaneseq
        %v1265 = vshrl.u32 %v1264, 7
        %v1266 = vsub.s32 %v1263, %v1265
        %v1267 = vrot.slane %v1251, %v1266
        %v1269 = vunpack.c.l.s4 1966171168
        %v1270 = vunpack.c.0.s8 %v1269
        %v1271 = vlaneseq
        %v1272 = vshrl.u32 %v1271, 7
        %v1273 = vsub.s32 %v1270, %v1272
        %v1274 = vrot.slane %v1252, %v1273
        %v1276 = vunpack.c.l.s4 1966171168
        %v1277 = vunpack.c.0.s8 %v1276
        %v1278 = vlaneseq
        %v1279 = vshrl.u32 %v1278, 7
        %v1280 = vsub.s32 %v1277, %v1279
        %v1281 = vrot.slane %v1253, %v1280
        %v1282 = vcombine.low %v1260, %v1274
        %v1283 = vcombine.low %v1267, %v1281
        %v1284 = vlaneseq
        %v1285 = vshrl.u32 %v1284, 7
        %v1286 = vsub.s32 0, %v1285
        %v1287 = vrot.slane %v1282, %v1286
        %v1288 = vlaneseq
        %v1289 = vshrl.u32 %v1288, 7
        %v1290 = vsub.s32 1, %v1289
        %v1291 = vrot.slane %v1282, %v1290
        %v1292 = vlaneseq
        %v1293 = vshrl.u32 %v1292, 7
        %v1294 = vsub.s32 2, %v1293
        %v1295 = vrot.slane %v1282, %v1294
        %v1296 = vlaneseq
        %v1297 = vshrl.u32 %v1296, 7
        %v1298 = vsub.s32 3, %v1297
        %v1299 = vrot.slane %v1282, %v1298
        %v1300 = vlaneseq
        %v1301 = vshrl.u32 %v1300, 7
        %v1302 = vsub.s32 4, %v1301
        %v1303 = vrot.slane %v1282, %v1302
        %v1304 = vlaneseq
        %v1305 = vshrl.u32 %v1304, 7
        %v1306 = vsub.s32 5, %v1305
        %v1307 = vrot.slane %v1282, %v1306
        %v1308 = vlaneseq
        %v1309 = vshrl.u32 %v1308, 7
        %v1310 = vsub.s32 6, %v1309
        %v1311 = vrot.slane %v1282, %v1310
        %v1312 = vlaneseq
        %v1313 = vshrl.u32 %v1312, 7
        %v1314 = vsub.s32 7, %v1313
        %v1315 = vrot.slane %v1282, %v1314
        %v1316 = vlaneseq
        %v1317 = vshrl.u32 %v1316, 7
        %v1318 = vsub.s32 0, %v1317
        %v1319 = vrot.slane %v1283, %v1318
        %v1320 = vlaneseq
        %v1321 = vshrl.u32 %v1320, 7
        %v1322 = vsub.s32 1, %v1321
        %v1323 = vrot.slane %v1283, %v1322
        %v1324 = vlaneseq
        %v1325 = vshrl.u32 %v1324, 7
        %v1326 = vsub.s32 2, %v1325
        %v1327 = vrot.slane %v1283, %v1326
        %v1328 = vlaneseq
        %v1329 = vshrl.u32 %v1328, 7
        %v1330 = vsub.s32 3, %v1329
        %v1331 = vrot.slane %v1283, %v1330
        %v1332 = vlaneseq
        %v1333 = vshrl.u32 %v1332, 7
        %v1334 = vsub.s32 4, %v1333
        %v1335 = vrot.slane %v1283, %v1334
        %v1336 = vlaneseq
        %v1337 = vshrl.u32 %v1336, 7
        %v1338 = vsub.s32 5, %v1337
        %v1339 = vrot.slane %v1283, %v1338
        %v1340 = vlaneseq
        %v1341 = vshrl.u32 %v1340, 7
        %v1342 = vsub.s32 6, %v1341
        %v1343 = vrot.slane %v1283, %v1342
        %v1344 = vlaneseq
        %v1345 = vshrl.u32 %v1344, 7
        %v1346 = vsub.s32 7, %v1345
        %v1347 = vrot.slane %v1283, %v1346
        %v1364 = vadd.f32 %v810, %v1287
        %v1365 = vadd.f32 %v812, %v1291
        %v1366 = vadd.f32 %v853, %v1295
        %v1367 = vadd.f32 %v855, %v1299
        %v1368 = vadd.f32 %v896, %v1303
        %v1369 = vadd.f32 %v898, %v1307
        %v1370 = vadd.f32 %v939, %v1311
        %v1371 = vadd.f32 %v941, %v1315
        %v1372 = vadd.f32 %v814, %v1319
        %v1373 = vadd.f32 %v816, %v1323
        %v1374 = vadd.f32 %v857, %v1327
        %v1375 = vadd.f32 %v859, %v1331
        %v1376 = vadd.f32 %v900, %v1335
        %v1377 = vadd.f32 %v902, %v1339
        %v1378 = vadd.f32 %v943, %v1343
        %v1379 = vadd.f32 %v945, %v1347
        %v1380 = vld [vmem:[%s513] sm:$0xff]
        %v1382 = vlaneseq
        %v1383 = vshrl.u32 %v1382, 7
        %v1384 = vsub.s32 0, %v1383
        %v1385 = vrot.slane %v1380, %v1384
        %v1386 = vlaneseq
        %v1387 = vshrl.u32 %v1386, 7
        %v1388 = vsub.s32 1, %v1387
        %v1389 = vrot.slane %v1380, %v1388
        %v1390 = vlaneseq
        %v1391 = vshrl.u32 %v1390, 7
        %v1392 = vsub.s32 2, %v1391
        %v1393 = vrot.slane %v1380, %v1392
        %v1394 = vlaneseq
        %v1395 = vshrl.u32 %v1394, 7
        %v1396 = vsub.s32 3, %v1395
        %v1397 = vrot.slane %v1380, %v1396
        %v1398 = vlaneseq
        %v1399 = vshrl.u32 %v1398, 7
        %v1400 = vsub.s32 4, %v1399
        %v1401 = vrot.slane %v1380, %v1400
        %v1402 = vlaneseq
        %v1403 = vshrl.u32 %v1402, 7
        %v1404 = vsub.s32 5, %v1403
        %v1405 = vrot.slane %v1380, %v1404
        %v1406 = vlaneseq
        %v1407 = vshrl.u32 %v1406, 7
        %v1408 = vsub.s32 6, %v1407
        %v1409 = vrot.slane %v1380, %v1408
        %v1410 = vlaneseq
        %v1411 = vshrl.u32 %v1410, 7
        %v1412 = vsub.s32 7, %v1411
        %v1413 = vrot.slane %v1380, %v1412
        %v1422 = vadd.f32 %v1364, %v1385
        %v1423 = vadd.f32 %v1365, %v1389
        %v1424 = vadd.f32 %v1366, %v1393
        %v1425 = vadd.f32 %v1367, %v1397
        %v1426 = vadd.f32 %v1368, %v1401
        %v1427 = vadd.f32 %v1369, %v1405
        %v1428 = vadd.f32 %v1370, %v1409
        %v1429 = vadd.f32 %v1371, %v1413
        %v1430 = vadd.f32 %v1372, %v1385
        %v1431 = vadd.f32 %v1373, %v1389
        %v1432 = vadd.f32 %v1374, %v1393
        %v1433 = vadd.f32 %v1375, %v1397
        %v1434 = vadd.f32 %v1376, %v1401
        %v1435 = vadd.f32 %v1377, %v1405
        %v1436 = vadd.f32 %v1378, %v1409
        %v1437 = vadd.f32 %v1379, %v1413
        %v1438 = vmax.f32 %v1422, 0.0
        %v1439 = vmax.f32 %v1423, 0.0
        %v1440 = vmax.f32 %v1424, 0.0
        %v1441 = vmax.f32 %v1425, 0.0
        %v1442 = vmax.f32 %v1426, 0.0
        %v1443 = vmax.f32 %v1427, 0.0
        %v1444 = vmax.f32 %v1428, 0.0
        %v1445 = vmax.f32 %v1429, 0.0
        %v1446 = vmax.f32 %v1430, 0.0
        %v1447 = vmax.f32 %v1431, 0.0
        %v1448 = vmax.f32 %v1432, 0.0
        %v1449 = vmax.f32 %v1433, 0.0
        %v1450 = vmax.f32 %v1434, 0.0
        %v1451 = vmax.f32 %v1435, 0.0
        %v1452 = vmax.f32 %v1436, 0.0
        %v1453 = vmax.f32 %v1437, 0.0
        %v1454 = vld [vmem:[%s522] sm:$0xff]
        %v1456 = vlaneseq
        %v1457 = vshrl.u32 %v1456, 7
        %v1458 = vsub.s32 0, %v1457
        %v1459 = vrot.slane %v1454, %v1458
        %v1460 = vlaneseq
        %v1461 = vshrl.u32 %v1460, 7
        %v1462 = vsub.s32 1, %v1461
        %v1463 = vrot.slane %v1454, %v1462
        %v1464 = vlaneseq
        %v1465 = vshrl.u32 %v1464, 7
        %v1466 = vsub.s32 2, %v1465
        %v1467 = vrot.slane %v1454, %v1466
        %v1468 = vlaneseq
        %v1469 = vshrl.u32 %v1468, 7
        %v1470 = vsub.s32 3, %v1469
        %v1471 = vrot.slane %v1454, %v1470
        %v1472 = vlaneseq
        %v1473 = vshrl.u32 %v1472, 7
        %v1474 = vsub.s32 4, %v1473
        %v1475 = vrot.slane %v1454, %v1474
        %v1476 = vlaneseq
        %v1477 = vshrl.u32 %v1476, 7
        %v1478 = vsub.s32 5, %v1477
        %v1479 = vrot.slane %v1454, %v1478
        %v1480 = vlaneseq
        %v1481 = vshrl.u32 %v1480, 7
        %v1482 = vsub.s32 6, %v1481
        %v1483 = vrot.slane %v1454, %v1482
        %v1484 = vlaneseq
        %v1485 = vshrl.u32 %v1484, 7
        %v1486 = vsub.s32 7, %v1485
        %v1487 = vrot.slane %v1454, %v1486
        %v1496 = vmul.f32 %v1438, %v1459
        %v1497 = vmul.f32 %v1439, %v1463
        %v1498 = vmul.f32 %v1440, %v1467
        %v1499 = vmul.f32 %v1441, %v1471
        %v1500 = vmul.f32 %v1442, %v1475
        %v1501 = vmul.f32 %v1443, %v1479
        %v1502 = vmul.f32 %v1444, %v1483
        %v1503 = vmul.f32 %v1445, %v1487
        %v1504 = vmul.f32 %v1446, %v1459
        %v1505 = vmul.f32 %v1447, %v1463
        %v1506 = vmul.f32 %v1448, %v1467
        %v1507 = vmul.f32 %v1449, %v1471
        %v1508 = vmul.f32 %v1450, %v1475
        %v1509 = vmul.f32 %v1451, %v1479
        %v1510 = vmul.f32 %v1452, %v1483
        %v1511 = vmul.f32 %v1453, %v1487
        %v1512 = vadd.f32 %v1496, %v1497
        %v1513 = vadd.f32 %v1512, %v1498
        %v1514 = vadd.f32 %v1513, %v1499
        %v1515 = vadd.f32 %v1514, %v1500
        %v1516 = vadd.f32 %v1515, %v1501
        %v1517 = vadd.f32 %v1516, %v1502
        %v1518 = vadd.f32 %v1517, %v1503
        %1519 = vadd.xlane.f32.xlu0 %v1518
        %v1520 = vpop.xlane.xlu0 %1519
        %v1521 = vadd.f32 %v1504, %v1505
        %v1522 = vadd.f32 %v1521, %v1506
        %v1523 = vadd.f32 %v1522, %v1507
        %v1524 = vadd.f32 %v1523, %v1508
        %v1525 = vadd.f32 %v1524, %v1509
        %v1526 = vadd.f32 %v1525, %v1510
        %v1527 = vadd.f32 %v1526, %v1511
        %1528 = vadd.xlane.f32.xlu0 %v1527
        %v1529 = vpop.xlane.xlu0 %1528
        %v1532 = vlaneseq
        %v1533 = vand.u32 %v1532, 127
        %v1534 = vlaneseq
        %v1535 = vshrl.u32 %v1534, 7
        %v1536 = vsub.s32 %v1533, %v1535
        %v1537 = vrot.slane %v1520, %v1536
        %v1538 = vlaneseq
        %v1539 = vshrl.u32 %v1538, 7
        %v1540 = vsub.s32 %v1533, %v1539
        %v1541 = vrot.slane %v1529, %v1540
        %vm1542 = vcmask 1041409
        %v1543 = vsel %vm1542, %v1541, %v1537
        %vm1545 = vcmask 58368
        %v1546 = vsel %vm1545, %v1543, -inf
        %1547 = vmax.xlane.f32.xlu0 %v1546
        %v1548 = vpop.xlane.xlu0 %1547
        %v1550 = vlaneseq
        %v1551 = vshrl.u32 %v1550, 7
        %v1552 = vsub.s32 0, %v1551
        %v1553 = vrot.slane %v1548, %v1552
        %v1554 = vlaneseq
        %v1555 = vshrl.u32 %v1554, 7
        %v1556 = vsub.s32 1, %v1555
        %v1557 = vrot.slane %v1548, %v1556
        %v1560 = vsub.f32 %v1520, %v1553
        %v1561 = vsub.f32 %v1529, %v1557
        %v1562 = vmul.f32 %v1560, 1.442695
        %v1563 = vpow.pop %v1562
        %v1564 = vmul.f32 %v1561, 1.442695
        %v1565 = vpow.pop %v1564
        %1568 = vset.pattern.permute.xlu0 0
        %1569 = vperm.xlu0 %1568, %v1563
        %v1570 = vpop.permute.xlu0 %1569
        %1571 = vset.pattern.permute.xlu0 0
        %1572 = vperm.xlu0 %1571, %v1565
        %v1573 = vpop.permute.xlu0 %1572
        %v1574 = vlaneseq
        %v1575 = vshrl.u32 %v1574, 7
        %v1576 = vsub.s32 %v1533, %v1575
        %v1577 = vrot.slane %v1570, %v1576
        %v1578 = vlaneseq
        %v1579 = vshrl.u32 %v1578, 7
        %v1580 = vsub.s32 %v1533, %v1579
        %v1581 = vrot.slane %v1573, %v1580
        %v1582 = vsel %vm1542, %v1581, %v1577
        %v1584 = vsel %vm1545, %v1582, 0.0
        %1585 = vadd.xlane.f32.xlu0 %v1584
        %v1586 = vpop.xlane.xlu0 %1585
        %v1588 = vlaneseq
        %v1589 = vshrl.u32 %v1588, 7
        %v1590 = vsub.s32 0, %v1589
        %v1591 = vrot.slane %v1586, %v1590
        %v1592 = vlaneseq
        %v1593 = vshrl.u32 %v1592, 7
        %v1594 = vsub.s32 1, %v1593
        %v1595 = vrot.slane %v1586, %v1594
        %v1598 = vrcp.pop %v1591
        %v1599 = vmul.f32 %v1563, %v1598
        %v1600 = vrcp.pop %v1595
        %v1601 = vmul.f32 %v1565, %v1600
        %v1602 = vpack.c.bf16 %v1599, %v1599
        %v1603 = vpack.c.bf16 %v1601, %v1601
        %v1605 = vunpack.c.l.b16 %v1602
        %1606 = vset.pattern.permute.xlu0 0
        %1607 = vperm.xlu0 %1606, %v1605
        %v1608 = vpop.permute.xlu0 %1607
        %v1609 = vlaneseq
        %v1610 = vshrl.u32 %v1609, 7
        %v1611 = vsub.s32 %v1533, %v1610
        %v1612 = vrot.slane %v1608, %v1611
        %v1613 = vpack.c.b16 %v1612, %v1612
        %vm1614 = vcmask 64512
        %v1616 = vsel %vm1614, %v1613, 0
        %vm1618 = vcmask 1043456
        %v1620 = vsel %vm1618, %v595, 0
        %1622 = vmatprep.subr.bf16.mxu0 0
        %1623 = vmatpush1.bf16.msra.mxu0 0
        %1624 = vmatprep.subr.bf16.mxu0 0
        %1625 = vmatpush1.bf16.msra.mxu0 0
        %1626 = vmatprep.subr.bf16.mxu0 0
        %1627 = vmatpush1.bf16.msra.mxu0 0
        %1628 = vmatprep.subr.bf16.mxu0 0
        %1629 = vmatpush1.bf16.msra.mxu0 0
        %1630 = vmatprep.subr.bf16.mxu0 0
        %1631 = vmatpush1.bf16.msra.mxu0 0
        %1632 = vmatprep.subr.bf16.mxu0 0
        %1633 = vmatpush1.bf16.msra.mxu0 0
        %1634 = vmatprep.subr.bf16.mxu0 0
        %1635 = vmatpush1.bf16.msra.mxu0 0
        %1636 = vmatprep.subr.bf16.mxu0 0
        %1637 = vmatpush1.bf16.msra.mxu0 %v1620
        %1638 = vmatprep.subr.bf16.mxu0 0
        %1639 = vmatpush2.bf16.msra.mxu0 0
        %1640 = vmatprep.subr.bf16.mxu0 0
        %1641 = vmatpush2.bf16.msra.mxu0 0
        %1642 = vmatprep.subr.bf16.mxu0 0
        %1643 = vmatpush2.bf16.msra.mxu0 0
        %1644 = vmatprep.subr.bf16.mxu0 0
        %1645 = vmatpush2.bf16.msra.mxu0 0
        %1646 = vmatprep.subr.bf16.mxu0 0
        %1647 = vmatpush2.bf16.msra.mxu0 0
        %1648 = vmatprep.subr.bf16.mxu0 0
        %1649 = vmatpush2.bf16.msra.mxu0 0
        %1650 = vmatprep.subr.bf16.mxu0 0
        %1651 = vmatpush2.bf16.msra.mxu0 0
        %1652 = vmatprep.subr.bf16.mxu0 0
        %1653 = vmatpush2.bf16.msra.mxu0 0
        %1654 = vmatprep.mubr.bf16.mxu0 0
        %1655 = vmatmul.mubr.bf16.gmra.mxu0 %v1616
        %v1656 = vpop.f32.mrf.mxu0
        %v1657 = vadd.f32 0.0, %v1656
        %v1658 = vpop.f32.mrf.mxu0
        %v1659 = vpop.f32.mrf.mxu0
        %v1660 = vpop.f32.mrf.mxu0
        %1661 = vdwg.mxu0
        %v1663 = vunpack.c.l.b16 %v1603
        %1664 = vset.pattern.permute.xlu0 0
        %1665 = vperm.xlu0 %1664, %v1663
        %v1666 = vpop.permute.xlu0 %1665
        %v1667 = vlaneseq
        %v1668 = vshrl.u32 %v1667, 7
        %v1669 = vsub.s32 %v1533, %v1668
        %v1670 = vrot.slane %v1666, %v1669
        %v1671 = vpack.c.b16 %v1670, %v1670
        %v1673 = vsel %vm1614, %v1671, 0
        %v1676 = vsel %vm1618, %v596, 0
        %1678 = vmatprep.subr.bf16.mxu0 0
        %1679 = vmatpush1.bf16.msra.mxu0 0
        %1680 = vmatprep.subr.bf16.mxu0 0
        %1681 = vmatpush1.bf16.msra.mxu0 0
        %1682 = vmatprep.subr.bf16.mxu0 0
        %1683 = vmatpush1.bf16.msra.mxu0 0
        %1684 = vmatprep.subr.bf16.mxu0 0
        %1685 = vmatpush1.bf16.msra.mxu0 0
        %1686 = vmatprep.subr.bf16.mxu0 0
        %1687 = vmatpush1.bf16.msra.mxu0 0
        %1688 = vmatprep.subr.bf16.mxu0 0
        %1689 = vmatpush1.bf16.msra.mxu0 0
        %1690 = vmatprep.subr.bf16.mxu0 0
        %1691 = vmatpush1.bf16.msra.mxu0 0
        %1692 = vmatprep.subr.bf16.mxu0 0
        %1693 = vmatpush1.bf16.msra.mxu0 %v1676
        %1694 = vmatprep.subr.bf16.mxu0 0
        %1695 = vmatpush2.bf16.msra.mxu0 0
        %1696 = vmatprep.subr.bf16.mxu0 0
        %1697 = vmatpush2.bf16.msra.mxu0 0
        %1698 = vmatprep.subr.bf16.mxu0 0
        %1699 = vmatpush2.bf16.msra.mxu0 0
        %1700 = vmatprep.subr.bf16.mxu0 0
        %1701 = vmatpush2.bf16.msra.mxu0 0
        %1702 = vmatprep.subr.bf16.mxu0 0
        %1703 = vmatpush2.bf16.msra.mxu0 0
        %1704 = vmatprep.subr.bf16.mxu0 0
        %1705 = vmatpush2.bf16.msra.mxu0 0
        %1706 = vmatprep.subr.bf16.mxu0 0
        %1707 = vmatpush2.bf16.msra.mxu0 0
        %1708 = vmatprep.subr.bf16.mxu0 0
        %1709 = vmatpush2.bf16.msra.mxu0 0
        %1710 = vmatprep.mubr.bf16.mxu0 0
        %1711 = vmatmul.mubr.bf16.gmra.mxu0 %v1673
        %v1712 = vpop.f32.mrf.mxu0
        %v1713 = vadd.f32 0.0, %v1712
        %v1714 = vpop.f32.mrf.mxu0
        %v1715 = vpop.f32.mrf.mxu0
        %v1716 = vpop.f32.mrf.mxu0
        %1717 = vdwg.mxu0
        %v1718 = vld [vmem:[#allocation2] sm:$0x3]
        %v1719 = vpack.c.bf16 %v1657, %v1657
        %v1720 = vpack.c.bf16 %v1713, %v1713
        %v1721 = vld [vmem:[%s535] sm:$0xf]
        %v1722 = vld [vmem:[%s535 + $0x4] sm:$0xf]
        %v1723 = vld [vmem:[%s535 + $0x8] sm:$0xf]
        %v1724 = vld [vmem:[%s535 + $0xc] sm:$0xf]
        %v1727 = vunpack.c.l.b16 %v1719
        %v1728 = vunpack.c.l.b16 %v1720
        %v1729 = vrot.slane %v1728, 7
        %v1730 = vsel %vm1542, %v1729, %v1727
        %v1731 = vpack.c.b16 %v1730, %v1730
        %v1736 = vunpack.c.l.b16 %v1721
        %v1737 = vunpack.c.l.b16 %v1722
        %v1738 = vunpack.c.l.b16 %v1723
        %v1739 = vunpack.c.l.b16 %v1724
        %v1740 = vpack.c.b16 %v1737, %v1736
        %v1741 = vpack.c.b16 %v1739, %v1738
        %v1745 = vsel %vm771, %v1731, 0
        %1747 = vmatprep.subr.bf16.mxu0 0
        %1748 = vmatpush1.bf16.msra.mxu0 0
        %1749 = vmatprep.subr.bf16.mxu0 0
        %1750 = vmatpush1.bf16.msra.mxu0 0
        %1751 = vmatprep.subr.bf16.mxu0 0
        %1752 = vmatpush1.bf16.msra.mxu0 0
        %1753 = vmatprep.subr.bf16.mxu0 0
        %1754 = vmatpush1.bf16.msra.mxu0 0
        %1755 = vmatprep.subr.bf16.mxu0 0
        %1756 = vmatpush1.bf16.msra.mxu0 0
        %1757 = vmatprep.subr.bf16.mxu0 0
        %1758 = vmatpush1.bf16.msra.mxu0 0
        %1759 = vmatprep.subr.bf16.mxu0 0
        %1760 = vmatpush1.bf16.msra.mxu0 %v1741
        %1761 = vmatprep.subr.bf16.mxu0 0
        %1762 = vmatpush1.bf16.msra.mxu0 %v1740
        %1763 = vmatprep.subr.bf16.mxu0 0
        %1764 = vmatpush2.bf16.msra.mxu0 0
        %1765 = vmatprep.subr.bf16.mxu0 0
        %1766 = vmatpush2.bf16.msra.mxu0 0
        %1767 = vmatprep.subr.bf16.mxu0 0
        %1768 = vmatpush2.bf16.msra.mxu0 0
        %1769 = vmatprep.subr.bf16.mxu0 0
        %1770 = vmatpush2.bf16.msra.mxu0 0
        %1771 = vmatprep.subr.bf16.mxu0 0
        %1772 = vmatpush2.bf16.msra.mxu0 0
        %1773 = vmatprep.subr.bf16.mxu0 0
        %1774 = vmatpush2.bf16.msra.mxu0 0
        %1775 = vmatprep.subr.bf16.mxu0 0
        %1776 = vmatpush2.bf16.msra.mxu0 0
        %1777 = vmatprep.subr.bf16.mxu0 0
        %1778 = vmatpush2.bf16.msra.mxu0 0
        %1779 = vmatprep.mubr.bf16.mxu0 0
        %1780 = vmatmul.mubr.bf16.gmra.mxu0 %v1745
        %v1781 = vpop.f32.mrf.mxu0
        %v1782 = vadd.f32 0.0, %v1781
        %v1783 = vpop.f32.mrf.mxu0
        %v1784 = vpop.f32.mrf.mxu0
        %v1785 = vpop.f32.mrf.mxu0
        %1786 = vdwg.mxu0
        %v1787 = vadd.f32 %v1718, %v1782
        %vm1788 = vcmask 517120
        %1789 = vst.msk [vmem:[#allocation2] sm:$0x3] %vm1788, %v1787
        %p1790 = scmp.eq.s32.totalorder %s28, 1
        // Predicated region
        $region105: #{tpu_custom_call.1} parent=63 // pred_check
          %p1791 = pneg %p1790
        $region106: #{tpu_custom_call.1} parent=63 // pred_check_branch
          %1793 = sbr.rel (%p1791) target = $region108
        $region107: #{tpu_custom_call.1} parent=63 // pred_region
          %v1794 = vld [vmem:[#allocation2] sm:$0x3]
          %v1795 = vmax.f32 %v1794, 0.0
          %v1796 = vpack.c.bf16 %v1795, %v1795
          %v1797 = vld [vmem:[#allocation15] sm:$0xf]
          %v1798 = vld [vmem:[#allocation15 + $0x4] sm:$0xf]
          %v1799 = vld [vmem:[#allocation15 + $0x8] sm:$0xf]
          %v1800 = vld [vmem:[#allocation15 + $0xc] sm:$0xf]
          %v1801 = vld [vmem:[#allocation15 + $0x10] sm:$0xf]
          %v1802 = vld [vmem:[#allocation15 + $0x14] sm:$0xf]
          %v1803 = vld [vmem:[#allocation15 + $0x18] sm:$0xf]
          %v1804 = vld [vmem:[#allocation15 + $0x1c] sm:$0xf]
          %v1805 = vld [vmem:[%s10] sm:$0x1]
          %v1807 = vlaneseq
          %v1808 = vshrl.u32 %v1807, 7
          %v1809 = vsub.s32 0, %v1808
          %v1810 = vrot.slane %v1805, %v1809
          %v1820 = vunpack.c.l.b16 %v1797
          %v1821 = vunpack.c.l.b16 %v1798
          %v1822 = vunpack.c.l.b16 %v1799
          %v1823 = vunpack.c.l.b16 %v1800
          %v1824 = vunpack.c.l.b16 %v1801
          %v1825 = vunpack.c.l.b16 %v1802
          %v1826 = vunpack.c.l.b16 %v1803
          %v1827 = vunpack.c.l.b16 %v1804
          %v1828 = vpack.c.b16 %v1821, %v1820
          %v1829 = vpack.c.b16 %v1823, %v1822
          %v1830 = vpack.c.b16 %v1825, %v1824
          %v1831 = vpack.c.b16 %v1827, %v1826
          %vm1836 = vcmask 523264
          %v1838 = vsel %vm1836, %v1796, 0
          %1840 = vmatprep.subr.bf16.mxu0 0
          %1841 = vmatpush1.bf16.msra.mxu0 0
          %1842 = vmatprep.subr.bf16.mxu0 0
          %1843 = vmatpush1.bf16.msra.mxu0 0
          %1844 = vmatprep.subr.bf16.mxu0 0
          %1845 = vmatpush1.bf16.msra.mxu0 0
          %1846 = vmatprep.subr.bf16.mxu0 0
          %1847 = vmatpush1.bf16.msra.mxu0 0
          %1848 = vmatprep.subr.bf16.mxu0 0
          %1849 = vmatpush1.bf16.msra.mxu0 %v1831
          %1850 = vmatprep.subr.bf16.mxu0 0
          %1851 = vmatpush1.bf16.msra.mxu0 %v1830
          %1852 = vmatprep.subr.bf16.mxu0 0
          %1853 = vmatpush1.bf16.msra.mxu0 %v1829
          %1854 = vmatprep.subr.bf16.mxu0 0
          %1855 = vmatpush1.bf16.msra.mxu0 %v1828
          %1856 = vmatprep.subr.bf16.mxu0 0
          %1857 = vmatpush2.bf16.msra.mxu0 0
          %1858 = vmatprep.subr.bf16.mxu0 0
          %1859 = vmatpush2.bf16.msra.mxu0 0
          %1860 = vmatprep.subr.bf16.mxu0 0
          %1861 = vmatpush2.bf16.msra.mxu0 0
          %1862 = vmatprep.subr.bf16.mxu0 0
          %1863 = vmatpush2.bf16.msra.mxu0 0
          %1864 = vmatprep.subr.bf16.mxu0 0
          %1865 = vmatpush2.bf16.msra.mxu0 0
          %1866 = vmatprep.subr.bf16.mxu0 0
          %1867 = vmatpush2.bf16.msra.mxu0 0
          %1868 = vmatprep.subr.bf16.mxu0 0
          %1869 = vmatpush2.bf16.msra.mxu0 0
          %1870 = vmatprep.subr.bf16.mxu0 0
          %1871 = vmatpush2.bf16.msra.mxu0 0
          %1872 = vmatprep.mubr.bf16.mxu0 0
          %1873 = vmatmul.mubr.bf16.gmra.mxu0 %v1838
          %v1874 = vpop.f32.mrf.mxu0
          %v1875 = vadd.f32 %v1810, %v1874
          %v1876 = vpop.f32.mrf.mxu0
          %v1877 = vpop.f32.mrf.mxu0
          %v1878 = vpop.f32.mrf.mxu0
          %1879 = vdwg.mxu0
          %1880 = vst [vmem:[#allocation16] sm:$0x3] %v1875
        $region108: #{tpu_custom_call.1} parent=63 // pred_fallthru
          _
        // Predicated region
        $region109: #{tpu_custom_call.1} parent=63 // pred_check
          %p1881 = pneg %p297
        $region110: #{tpu_custom_call.1} parent=63 // pred_check_branch
          %1883 = sbr.rel (%p1881) target = $region112
        $region111: #{tpu_custom_call.1} parent=63 // pred_region
          %s1885 = ssub.s32 32, 32
          %1886 = vsyncadd [#allocation5], %s1885
          %s1888 = sshll.u32 [#allocation16], 4
          %s1889 = int_to_ptr.vmem [resolvable:$true] %s1888
          %1891 = dma.vmem_to_hbm [thread:$0]  %s1889, 32, %s11, [#allocation5]
        $region112: #{tpu_custom_call.1} parent=63 // pred_fallthru
          _
        // Predicated region
        $region113: #{tpu_custom_call.1} parent=63 // pred_check
          %p1892 = pneg %p297
        $region114: #{tpu_custom_call.1} parent=63 // pred_check_branch
          %1894 = sbr.rel (%p1892) target = $region116
        $region115: #{tpu_custom_call.1} parent=63 // pred_region
          %1895 = dma.done [#allocation5], 32
        $region116: #{tpu_custom_call.1} parent=63 // pred_fallthru
          _
      $region64: #{tpu_custom_call.1} parent=5 // pred_fallthru
        _
      %p1896 = scmp.le.s32.totalorder 2, %s23
      // Predicated region
      $region117: #{tpu_custom_call.1} parent=5 // pred_check
        %p1897 = pneg %p1896
      $region118: #{tpu_custom_call.1} parent=5 // pred_check_branch
        %1899 = sbr.rel (%p1897) target = $region120
      $region119: #{tpu_custom_call.1} parent=5 // pred_region
        %s1900 = ssub.s32 %s23, 2
      $region120: #{tpu_custom_call.1} parent=5 // pred_fallthru
        _
    $region6: #{tpu_custom_call.1} parent=1 // loop_footer
      %s27 = sadd.s32 1, %s23
    $region7: #{tpu_custom_call.1} parent=1 // loop_footer_branch
      %22 = sbr.rel target = $region3
    $region8: #{tpu_custom_call.1} parent=1 // loop_exit
      _
    %1901 = vsyncpa [#allocation4], 1
    %s1902 = scalar_lea.sflag [#allocation4], 1
    %1903 = vsyncpa %s1902, 1
    %1904 = vsyncpa [#allocation7], 1
    %1905 = vsyncpa [#allocation14], 1
    %s1906 = scalar_lea.sflag [#allocation14], 1
    %1907 = vsyncpa %s1906, 1
    %1908 = vsyncpa [#allocation5], 1
    %s1909 = scalar_lea.sflag [#allocation5], 1
    %1910 = vsyncpa %s1909, 1

</llo_original>
